<compile_context>
chip_gen: v7x
topology: tpu7x:2x2x1
jax: 0.10.0
libtpu: 0.0.40
codegen_flags: <defaults>
</compile_context>

<pallas_src>
import functools

import jax
import jax.numpy as jnp
from jax import lax
from jax.experimental import pallas as pl
from jax.experimental.pallas import tpu as pltpu


def _mha_kernel(x_ref, wqkv_ref, bqkv_ref, wp_ref, bp_ref, o_ref,
                *, num_heads: int, n_valid: int):
    """One grid step == Bt batch elements.

    x_ref   : (Bt, Np, E)  bf16 VMEM tile
    wqkv_ref: (E, 3E)      bf16, pre-transposed + fused [Wq | Wk | Wv/sqrt(E)]
    bqkv_ref: (1, 3E)      f32,  fused [bq | bk | bv/sqrt(E)]
    wp_ref  : (E, E)       bf16, pre-transposed projection weight
    bp_ref  : (1, E)       f32
    o_ref   : (Bt, Np, E)  f32 output tile
    """
    Bt, Np, E = x_ref.shape
    H = num_heads
    D = E // H
    rows = Bt * Np

    # Collapse (Bt, Np, E) -> (Bt*Np, E): leading-dim merge only, no relayout.
    x = x_ref[...].reshape(rows, E)                      # bf16

    # Fused QKV projection: one MXU pass (lane dim 3E), f32 accumulation,
    # one bias add, then ONE bf16 cast of the whole block.
    qkv = jnp.dot(x, wqkv_ref[...], preferred_element_type=jnp.float32)
    qkv_b = (qkv + bqkv_ref[...]).astype(jnp.bfloat16)   # (rows, 3E)

    # Key-padding mask is only materialized when the wrapper actually padded N
    # (static Python condition -> no code at aligned shapes).
    if n_valid < Np:
        key_valid = lax.broadcasted_iota(jnp.int32, (1, 1, Np), 2) < n_valid

    # Per-head attention, batched over the Bt batch elements of this tile.
    # The loop over heads is a small STATIC loop (H <= 12 for ViT): slice
    # starts stay static (cheap extracts) and the scheduler can pipeline the
    # per-head matmul pushes.  The output projection is fused per head, so
    # there is no heads_scratch and no sub-128-lane masked store.
    # NOTE: the full (Np, Np) energy matrix is materialized per head; fine for
    # ViT-scale N (~200).  Very long sequences would need a KV-tiled
    # online-softmax loop over an 'arbitrary' grid axis instead.
    acc = jnp.zeros((rows, E), jnp.float32)
    for h in range(H):
        lo = h * D
        q_h = qkv_b[:, lo:lo + D].reshape(Bt, Np, D)                 # (Bt,Np,D)
        k_h = qkv_b[:, E + lo:E + lo + D].reshape(Bt, Np, D)
        v_h = qkv_b[:, 2 * E + lo:2 * E + lo + D].reshape(Bt, Np, D)

        # energy = q @ k^T, contracting on D, batched over Bt.
        energy = jnp.einsum("bqd,bkd->bqk", q_h, k_h,
                            preferred_element_type=jnp.float32)      # f32
        if n_valid < Np:
            energy = jnp.where(key_valid, energy, -1e30)

        # softmax over keys (f32); denominator via EUP approx reciprocal.
        m = jnp.max(energy, axis=-1, keepdims=True)
        p = jnp.exp(energy - m)
        denom = jnp.sum(p, axis=-1, keepdims=True)
        att = p * pl.reciprocal(denom, approx=True)
        # (dropout p=0 is identity; 1/sqrt(E) already folded into the V weight)

        oh = jnp.einsum("bqk,bkd->bqd", att.astype(jnp.bfloat16), v_h,
                        preferred_element_type=jnp.float32)          # (Bt,Np,D)

        # Fused projection for this head: acc += oh @ Wp[h*D:(h+1)*D, :]
        # (sublane slice of the weight; lane-dense (rows, E) accumulator).
        acc = acc + jnp.dot(oh.reshape(rows, D).astype(jnp.bfloat16),
                            wp_ref[lo:lo + D, :],
                            preferred_element_type=jnp.float32)

    out = acc + bp_ref[...]
    o_ref[...] = out.reshape(Bt, Np, E).astype(o_ref.dtype)


def _tpu_budget():
    """Generation-aware tiling policy.

    Large-VMEM single-TC chips (v5e/v6e: 128 MiB, 1 TensorCore): one big tile,
    no multi-step minimum, raised VMEM limit.
    Small-VMEM dual-TC chips (v7x-class: 64 MiB, 2 TensorCores): smaller tile,
    keep >= 2 'parallel' grid steps so both cores get work, tighter limit.
    """
    vmem = 64 * 1024 * 1024
    try:
        info = pltpu.get_tpu_info()
        vmem = int(getattr(info, "vmem_capacity_bytes", vmem))
    except Exception:
        pass  # conservative fallback below
    if vmem >= 100 * 1024 * 1024:
        return dict(max_rows=1024, min_steps=1, vmem_limit=96 * 1024 * 1024)
    return dict(max_rows=512, min_steps=2, vmem_limit=48 * 1024 * 1024)


def _choose_batch_tile(B: int, rows_per_batch: int, max_rows: int,
                       min_steps: int) -> int:
    """Largest divisor Bt of B with Bt*rows_per_batch <= max_rows, keeping at
    least `min_steps` grid steps when possible (dual-TC chips only)."""
    best = 1
    for bt in range(1, B + 1):
        if B % bt != 0:
            continue
        if bt * rows_per_batch > max_rows:
            continue
        if B >= min_steps and B // bt < min_steps:
            continue
        best = bt
    return best


def multi_head_attention(x, params, *, num_heads: int):
    """x: (B, N, E) float32. params: dict of PyTorch-convention Linear weights."""
    B, N, E = x.shape
    assert E % num_heads == 0
    inv_scale = 1.0 / (E ** 0.5)      # module scales by sqrt(emb_size)

    # Pre-transpose to (in, out), fuse Q/K/V into one weight/bias, and fold the
    # 1/sqrt(emb_size) softmax scaling into the V weight+bias (constant fold).
    # Weights are bf16 MXU operands; biases stay f32 (added after f32 accum).
    wqkv = jnp.concatenate(
        [params["wq"].T, params["wk"].T, params["wv"].T * inv_scale], axis=1
    ).astype(jnp.bfloat16)                                   # (E, 3E)
    bqkv = jnp.concatenate(
        [params["bq"], params["bk"], params["bv"] * inv_scale], axis=0
    ).reshape(1, 3 * E).astype(jnp.float32)                  # (1, 3E)
    wp = params["wp"].T.astype(jnp.bfloat16)                 # (E, E)
    bp = params["bp"].reshape(1, E).astype(jnp.float32)      # (1, E)

    # Pad sequence to a sublane multiple (8); padded keys are masked in-kernel,
    # padded query rows are sliced off below.  (Padding to a lane multiple of
    # 128/256 would additionally make the (N,N) energy tiles fully lane-dense.)
    Np = ((N + 7) // 8) * 8
    x_bf = x.astype(jnp.bfloat16)
    if Np != N:
        x_bf = jnp.pad(x_bf, ((0, 0), (0, Np - N), (0, 0)))

    budget = _tpu_budget()
    Bt = _choose_batch_tile(B, Np, budget["max_rows"], budget["min_steps"])
    grid = (B // Bt,)

    kernel = functools.partial(_mha_kernel, num_heads=num_heads, n_valid=N)

    out = pl.pallas_call(
        kernel,
        out_shape=jax.ShapeDtypeStruct((B, Np, E), x.dtype),
        grid_spec=pltpu.PrefetchScalarGridSpec(
            num_scalar_prefetch=0,
            grid=grid,
            in_specs=[
                pl.BlockSpec((Bt, Np, E), lambda b: (b, 0, 0)),   # x
                pl.BlockSpec((E, 3 * E), lambda b: (0, 0)),       # fused QKV weight
                pl.BlockSpec((1, 3 * E), lambda b: (0, 0)),       # fused QKV bias
                pl.BlockSpec((E, E), lambda b: (0, 0)),           # projection weight
                pl.BlockSpec((1, E), lambda b: (0, 0)),           # projection bias
                # NOTE: the weight/bias blocks are grid-invariant; marking them
                # pipeline_mode=pl.Buffered(1) would drop their second buffer
                # (~4.5 MiB at ViT-base).  Left at the default for portability.
            ],
            out_specs=pl.BlockSpec((Bt, Np, E), lambda b: (b, 0, 0)),
        ),
        compiler_params=pltpu.CompilerParams(
            dimension_semantics=("parallel",),
            vmem_limit_bytes=budget["vmem_limit"],
        ),
    )(x_bf, wqkv, bqkv, wp, bp)

    return out[:, :N, :] if Np != N else out


def _reference(x, params, *, num_heads: int):
    """Pure-JAX f32 reference mirroring the PyTorch forward exactly."""
    B, N, E = x.shape
    H = num_heads
    D = E // H

    def lin(t, w, b):
        return jnp.einsum("bne,oe->bno", t, w) + b

    def split_heads(t):  # 'b n (h d) -> b h n d'
        return t.reshape(B, N, H, D).transpose(0, 2, 1, 3)

    q = split_heads(lin(x, params["wq"], params["bq"]))
    k = split_heads(lin(x, params["wk"], params["bk"]))
    v = split_heads(lin(x, params["wv"], params["bv"]))

    energy = jnp.einsum("bhqd,bhkd->bhqk", q, k)
    att = jax.nn.softmax(energy, axis=-1) / (E ** 0.5)
    out = jnp.einsum("bhal,bhlv->bhav", att, v)
    out = out.transpose(0, 2, 1, 3).reshape(B, N, E)   # 'b h n d -> b n (h d)'
    return lin(out, params["wp"], params["bp"])


def _init_params(key, emb_size):
    """Deterministic nn.Linear-style init (uniform +/- 1/sqrt(fan_in))."""
    bound = 1.0 / (emb_size ** 0.5)
    names = ["wq", "bq", "wk", "bk", "wv", "bv", "wp", "bp"]
    keys = jax.random.split(key, len(names))
    params = {}
    for n, k in zip(names, keys):
        shape = (emb_size, emb_size) if n.startswith("w") else (emb_size,)
        params[n] = jax.random.uniform(
            k, shape, dtype=jnp.float32, minval=-bound, maxval=bound)
    return params


if __name__ == "__main__":
    # Small but lane-dense shapes: batch=2, seq=16, emb=128 (multiple of 128), heads=4.
    B, N, E, H = 2, 16, 128, 4

    key = jax.random.PRNGKey(0)
    kx, kp = jax.random.split(key)
    x = jax.random.normal(kx, (B, N, E), dtype=jnp.float32)
    params = _init_params(kp, E)

    out = multi_head_attention(x, params, num_heads=H)
    out = jax.block_until_ready(out)

    ref = _reference(x, params, num_heads=H)
    assert out.shape == (B, N, E)
    # Kernel uses bf16 MXU operands + approx reciprocal -> loosened tolerance
    # vs the pure-f32 reference (flagged acceptable in the review).
    assert jnp.allclose(out, ref, atol=1e-2, rtol=1e-2), "mismatch vs reference"

    print("KERNEL_OK")
</pallas_src>

<mosaic_0001>
module attributes {stable_mosaic.version = 11 : i64} {
  func.func @_mha_kernel(%arg0: i32, %arg1: memref<1x16x128xbf16, #tpu.memory_space<vmem>>, %arg2: memref<128x384xbf16, #tpu.memory_space<vmem>>, %arg3: memref<1x384xf32, #tpu.memory_space<vmem>>, %arg4: memref<128x128xbf16, #tpu.memory_space<vmem>>, %arg5: memref<1x128xf32, #tpu.memory_space<vmem>>, %arg6: memref<1x16x128xf32, #tpu.memory_space<vmem>>) attributes {dimension_semantics = [#tpu.dimension_semantics<parallel>], iteration_bounds = array<i64: 2>, scalar_prefetch = 0 : i64, scratch_operands = 0 : i64, tpu.core_type = #tpu.core_type<tc>, window_params = [{transform_indices = @transform_0, window_bounds = array<i64: 1, 16, 128>}, {pipeline_mode = #tpu.pipeline_mode<synchronous>, transform_indices = @transform_1, window_bounds = array<i64: 128, 384>}, {pipeline_mode = #tpu.pipeline_mode<synchronous>, transform_indices = @transform_2, window_bounds = array<i64: 1, 384>}, {pipeline_mode = #tpu.pipeline_mode<synchronous>, transform_indices = @transform_3, window_bounds = array<i64: 128, 128>}, {pipeline_mode = #tpu.pipeline_mode<synchronous>, transform_indices = @transform_4, window_bounds = array<i64: 1, 128>}, {transform_indices = @transform_5, window_bounds = array<i64: 1, 16, 128>}]} {
    %c0 = arith.constant 0 : index
    %c0_0 = arith.constant 0 : index
    %c0_1 = arith.constant 0 : index
    %0 = vector.load %arg1[%c0, %c0_0, %c0_1] : memref<1x16x128xbf16, #tpu.memory_space<vmem>>, vector<1x16x128xbf16>
    %1 = vector.shape_cast %0 : vector<1x16x128xbf16> to vector<16x128xbf16>
    %c0_2 = arith.constant 0 : index
    %c0_3 = arith.constant 0 : index
    %2 = vector.load %arg2[%c0_2, %c0_3] : memref<128x384xbf16, #tpu.memory_space<vmem>>, vector<128x384xbf16>
    %cst = arith.constant dense<0.000000e+00> : vector<16x384xf32>
    %3 = tpu.matmul %1, %2, %cst {dimension_numbers = #tpu.dot_dimension_numbers<[1], [0], [0], [1], [0, 0, 1, 1], [], []>} : vector<16x128xbf16>, vector<128x384xbf16>, vector<16x384xf32> -> vector<16x384xf32>
    %c0_4 = arith.constant 0 : index
    %c0_5 = arith.constant 0 : index
    %4 = vector.load %arg3[%c0_4, %c0_5] : memref<1x384xf32, #tpu.memory_space<vmem>>, vector<1x384xf32>
    %5 = vector.broadcast %4 : vector<1x384xf32> to vector<16x384xf32>
    %6 = arith.addf %3, %5 : vector<16x384xf32>
    %7 = arith.truncf %6 : vector<16x384xf32> to vector<16x384xbf16>
    %cst_6 = arith.constant 0.000000e+00 : f32
    %8 = vector.broadcast %cst_6 : f32 to vector<16x128xf32>
    %9 = vector.extract_strided_slice %7 {offsets = [0, 0], sizes = [16, 32], strides = [1, 1]} : vector<16x384xbf16> to vector<16x32xbf16>
    %10 = vector.shape_cast %9 : vector<16x32xbf16> to vector<1x16x32xbf16>
    %11 = vector.extract_strided_slice %7 {offsets = [0, 128], sizes = [16, 32], strides = [1, 1]} : vector<16x384xbf16> to vector<16x32xbf16>
    %12 = vector.shape_cast %11 : vector<16x32xbf16> to vector<1x16x32xbf16>
    %13 = vector.extract_strided_slice %7 {offsets = [0, 256], sizes = [16, 32], strides = [1, 1]} : vector<16x384xbf16> to vector<16x32xbf16>
    %14 = vector.shape_cast %13 : vector<16x32xbf16> to vector<1x16x32xbf16>
    "tpu.trace_start"() <{level = 10 : i32, message = "bqd,bkd->bqk"}> : () -> ()
    %cst_7 = arith.constant dense<0.000000e+00> : vector<1x16x16xf32>
    %15 = tpu.matmul %10, %12, %cst_7 {dimension_numbers = #tpu.dot_dimension_numbers<[2], [2], [1], [1], [0, 0, 0, 1, 1, 1], [0], [0]>} : vector<1x16x32xbf16>, vector<1x16x32xbf16>, vector<1x16x16xf32> -> vector<1x16x16xf32>
    "tpu.trace_stop"() : () -> ()
    %cst_8 = arith.constant dense<0xFF800000> : vector<1x16xf32>
    %16 = vector.multi_reduction <maximumf>, %15, %cst_8 [2] : vector<1x16x16xf32> to vector<1x16xf32>
    %17 = vector.shape_cast %16 : vector<1x16xf32> to vector<1x16x1xf32>
    %18 = vector.broadcast %17 : vector<1x16x1xf32> to vector<1x16x16xf32>
    %19 = arith.subf %15, %18 : vector<1x16x16xf32>
    %20 = math.exp %19 : vector<1x16x16xf32>
    %cst_9 = arith.constant dense<0.000000e+00> : vector<1x16xf32>
    %21 = vector.multi_reduction <add>, %20, %cst_9 [2] : vector<1x16x16xf32> to vector<1x16xf32>
    %22 = vector.shape_cast %21 : vector<1x16xf32> to vector<1x16x1xf32>
    %23 = tpu.reciprocal %22 {approx = true} : vector<1x16x1xf32> -> vector<1x16x1xf32>
    %24 = vector.broadcast %23 : vector<1x16x1xf32> to vector<1x16x16xf32>
    %25 = arith.mulf %20, %24 : vector<1x16x16xf32>
    %26 = arith.truncf %25 : vector<1x16x16xf32> to vector<1x16x16xbf16>
    "tpu.trace_start"() <{level = 10 : i32, message = "bqk,bkd->bqd"}> : () -> ()
    %cst_10 = arith.constant dense<0.000000e+00> : vector<1x16x32xf32>
    %27 = tpu.matmul %26, %14, %cst_10 {dimension_numbers = #tpu.dot_dimension_numbers<[2], [1], [1], [2], [0, 0, 0, 1, 1, 2], [0], [0]>} : vector<1x16x16xbf16>, vector<1x16x32xbf16>, vector<1x16x32xf32> -> vector<1x16x32xf32>
    "tpu.trace_stop"() : () -> ()
    %28 = vector.shape_cast %27 : vector<1x16x32xf32> to vector<16x32xf32>
    %29 = arith.truncf %28 : vector<16x32xf32> to vector<16x32xbf16>
    %c0_11 = arith.constant 0 : index
    %c0_12 = arith.constant 0 : index
    %30 = vector.load %arg4[%c0_11, %c0_12] : memref<128x128xbf16, #tpu.memory_space<vmem>>, vector<32x128xbf16>
    %cst_13 = arith.constant dense<0.000000e+00> : vector<16x128xf32>
    %31 = tpu.matmul %29, %30, %cst_13 {dimension_numbers = #tpu.dot_dimension_numbers<[1], [0], [0], [1], [0, 0, 1, 1], [], []>} : vector<16x32xbf16>, vector<32x128xbf16>, vector<16x128xf32> -> vector<16x128xf32>
    %32 = arith.addf %8, %31 : vector<16x128xf32>
    %33 = vector.extract_strided_slice %7 {offsets = [0, 32], sizes = [16, 32], strides = [1, 1]} : vector<16x384xbf16> to vector<16x32xbf16>
    %34 = vector.shape_cast %33 : vector<16x32xbf16> to vector<1x16x32xbf16>
    %35 = vector.extract_strided_slice %7 {offsets = [0, 160], sizes = [16, 32], strides = [1, 1]} : vector<16x384xbf16> to vector<16x32xbf16>
    %36 = vector.shape_cast %35 : vector<16x32xbf16> to vector<1x16x32xbf16>
    %37 = vector.extract_strided_slice %7 {offsets = [0, 288], sizes = [16, 32], strides = [1, 1]} : vector<16x384xbf16> to vector<16x32xbf16>
    %38 = vector.shape_cast %37 : vector<16x32xbf16> to vector<1x16x32xbf16>
    "tpu.trace_start"() <{level = 10 : i32, message = "bqd,bkd->bqk"}> : () -> ()
    %cst_14 = arith.constant dense<0.000000e+00> : vector<1x16x16xf32>
    %39 = tpu.matmul %34, %36, %cst_14 {dimension_numbers = #tpu.dot_dimension_numbers<[2], [2], [1], [1], [0, 0, 0, 1, 1, 1], [0], [0]>} : vector<1x16x32xbf16>, vector<1x16x32xbf16>, vector<1x16x16xf32> -> vector<1x16x16xf32>
    "tpu.trace_stop"() : () -> ()
    %cst_15 = arith.constant dense<0xFF800000> : vector<1x16xf32>
    %40 = vector.multi_reduction <maximumf>, %39, %cst_15 [2] : vector<1x16x16xf32> to vector<1x16xf32>
    %41 = vector.shape_cast %40 : vector<1x16xf32> to vector<1x16x1xf32>
    %42 = vector.broadcast %41 : vector<1x16x1xf32> to vector<1x16x16xf32>
    %43 = arith.subf %39, %42 : vector<1x16x16xf32>
    %44 = math.exp %43 : vector<1x16x16xf32>
    %cst_16 = arith.constant dense<0.000000e+00> : vector<1x16xf32>
    %45 = vector.multi_reduction <add>, %44, %cst_16 [2] : vector<1x16x16xf32> to vector<1x16xf32>
    %46 = vector.shape_cast %45 : vector<1x16xf32> to vector<1x16x1xf32>
    %47 = tpu.reciprocal %46 {approx = true} : vector<1x16x1xf32> -> vector<1x16x1xf32>
    %48 = vector.broadcast %47 : vector<1x16x1xf32> to vector<1x16x16xf32>
    %49 = arith.mulf %44, %48 : vector<1x16x16xf32>
    %50 = arith.truncf %49 : vector<1x16x16xf32> to vector<1x16x16xbf16>
    "tpu.trace_start"() <{level = 10 : i32, message = "bqk,bkd->bqd"}> : () -> ()
    %cst_17 = arith.constant dense<0.000000e+00> : vector<1x16x32xf32>
    %51 = tpu.matmul %50, %38, %cst_17 {dimension_numbers = #tpu.dot_dimension_numbers<[2], [1], [1], [2], [0, 0, 0, 1, 1, 2], [0], [0]>} : vector<1x16x16xbf16>, vector<1x16x32xbf16>, vector<1x16x32xf32> -> vector<1x16x32xf32>
    "tpu.trace_stop"() : () -> ()
    %52 = vector.shape_cast %51 : vector<1x16x32xf32> to vector<16x32xf32>
    %53 = arith.truncf %52 : vector<16x32xf32> to vector<16x32xbf16>
    %c32 = arith.constant 32 : index
    %c0_18 = arith.constant 0 : index
    %54 = vector.load %arg4[%c32, %c0_18] : memref<128x128xbf16, #tpu.memory_space<vmem>>, vector<32x128xbf16>
    %cst_19 = arith.constant dense<0.000000e+00> : vector<16x128xf32>
    %55 = tpu.matmul %53, %54, %cst_19 {dimension_numbers = #tpu.dot_dimension_numbers<[1], [0], [0], [1], [0, 0, 1, 1], [], []>} : vector<16x32xbf16>, vector<32x128xbf16>, vector<16x128xf32> -> vector<16x128xf32>
    %56 = arith.addf %32, %55 : vector<16x128xf32>
    %57 = vector.extract_strided_slice %7 {offsets = [0, 64], sizes = [16, 32], strides = [1, 1]} : vector<16x384xbf16> to vector<16x32xbf16>
    %58 = vector.shape_cast %57 : vector<16x32xbf16> to vector<1x16x32xbf16>
    %59 = vector.extract_strided_slice %7 {offsets = [0, 192], sizes = [16, 32], strides = [1, 1]} : vector<16x384xbf16> to vector<16x32xbf16>
    %60 = vector.shape_cast %59 : vector<16x32xbf16> to vector<1x16x32xbf16>
    %61 = vector.extract_strided_slice %7 {offsets = [0, 320], sizes = [16, 32], strides = [1, 1]} : vector<16x384xbf16> to vector<16x32xbf16>
    %62 = vector.shape_cast %61 : vector<16x32xbf16> to vector<1x16x32xbf16>
    "tpu.trace_start"() <{level = 10 : i32, message = "bqd,bkd->bqk"}> : () -> ()
    %cst_20 = arith.constant dense<0.000000e+00> : vector<1x16x16xf32>
    %63 = tpu.matmul %58, %60, %cst_20 {dimension_numbers = #tpu.dot_dimension_numbers<[2], [2], [1], [1], [0, 0, 0, 1, 1, 1], [0], [0]>} : vector<1x16x32xbf16>, vector<1x16x32xbf16>, vector<1x16x16xf32> -> vector<1x16x16xf32>
    "tpu.trace_stop"() : () -> ()
    %cst_21 = arith.constant dense<0xFF800000> : vector<1x16xf32>
    %64 = vector.multi_reduction <maximumf>, %63, %cst_21 [2] : vector<1x16x16xf32> to vector<1x16xf32>
    %65 = vector.shape_cast %64 : vector<1x16xf32> to vector<1x16x1xf32>
    %66 = vector.broadcast %65 : vector<1x16x1xf32> to vector<1x16x16xf32>
    %67 = arith.subf %63, %66 : vector<1x16x16xf32>
    %68 = math.exp %67 : vector<1x16x16xf32>
    %cst_22 = arith.constant dense<0.000000e+00> : vector<1x16xf32>
    %69 = vector.multi_reduction <add>, %68, %cst_22 [2] : vector<1x16x16xf32> to vector<1x16xf32>
    %70 = vector.shape_cast %69 : vector<1x16xf32> to vector<1x16x1xf32>
    %71 = tpu.reciprocal %70 {approx = true} : vector<1x16x1xf32> -> vector<1x16x1xf32>
    %72 = vector.broadcast %71 : vector<1x16x1xf32> to vector<1x16x16xf32>
    %73 = arith.mulf %68, %72 : vector<1x16x16xf32>
    %74 = arith.truncf %73 : vector<1x16x16xf32> to vector<1x16x16xbf16>
    "tpu.trace_start"() <{level = 10 : i32, message = "bqk,bkd->bqd"}> : () -> ()
    %cst_23 = arith.constant dense<0.000000e+00> : vector<1x16x32xf32>
    %75 = tpu.matmul %74, %62, %cst_23 {dimension_numbers = #tpu.dot_dimension_numbers<[2], [1], [1], [2], [0, 0, 0, 1, 1, 2], [0], [0]>} : vector<1x16x16xbf16>, vector<1x16x32xbf16>, vector<1x16x32xf32> -> vector<1x16x32xf32>
    "tpu.trace_stop"() : () -> ()
    %76 = vector.shape_cast %75 : vector<1x16x32xf32> to vector<16x32xf32>
    %77 = arith.truncf %76 : vector<16x32xf32> to vector<16x32xbf16>
    %c64 = arith.constant 64 : index
    %c0_24 = arith.constant 0 : index
    %78 = vector.load %arg4[%c64, %c0_24] : memref<128x128xbf16, #tpu.memory_space<vmem>>, vector<32x128xbf16>
    %cst_25 = arith.constant dense<0.000000e+00> : vector<16x128xf32>
    %79 = tpu.matmul %77, %78, %cst_25 {dimension_numbers = #tpu.dot_dimension_numbers<[1], [0], [0], [1], [0, 0, 1, 1], [], []>} : vector<16x32xbf16>, vector<32x128xbf16>, vector<16x128xf32> -> vector<16x128xf32>
    %80 = arith.addf %56, %79 : vector<16x128xf32>
    %81 = vector.extract_strided_slice %7 {offsets = [0, 96], sizes = [16, 32], strides = [1, 1]} : vector<16x384xbf16> to vector<16x32xbf16>
    %82 = vector.shape_cast %81 : vector<16x32xbf16> to vector<1x16x32xbf16>
    %83 = vector.extract_strided_slice %7 {offsets = [0, 224], sizes = [16, 32], strides = [1, 1]} : vector<16x384xbf16> to vector<16x32xbf16>
    %84 = vector.shape_cast %83 : vector<16x32xbf16> to vector<1x16x32xbf16>
    %85 = vector.extract_strided_slice %7 {offsets = [0, 352], sizes = [16, 32], strides = [1, 1]} : vector<16x384xbf16> to vector<16x32xbf16>
    %86 = vector.shape_cast %85 : vector<16x32xbf16> to vector<1x16x32xbf16>
    "tpu.trace_start"() <{level = 10 : i32, message = "bqd,bkd->bqk"}> : () -> ()
    %cst_26 = arith.constant dense<0.000000e+00> : vector<1x16x16xf32>
    %87 = tpu.matmul %82, %84, %cst_26 {dimension_numbers = #tpu.dot_dimension_numbers<[2], [2], [1], [1], [0, 0, 0, 1, 1, 1], [0], [0]>} : vector<1x16x32xbf16>, vector<1x16x32xbf16>, vector<1x16x16xf32> -> vector<1x16x16xf32>
    "tpu.trace_stop"() : () -> ()
    %cst_27 = arith.constant dense<0xFF800000> : vector<1x16xf32>
    %88 = vector.multi_reduction <maximumf>, %87, %cst_27 [2] : vector<1x16x16xf32> to vector<1x16xf32>
    %89 = vector.shape_cast %88 : vector<1x16xf32> to vector<1x16x1xf32>
    %90 = vector.broadcast %89 : vector<1x16x1xf32> to vector<1x16x16xf32>
    %91 = arith.subf %87, %90 : vector<1x16x16xf32>
    %92 = math.exp %91 : vector<1x16x16xf32>
    %cst_28 = arith.constant dense<0.000000e+00> : vector<1x16xf32>
    %93 = vector.multi_reduction <add>, %92, %cst_28 [2] : vector<1x16x16xf32> to vector<1x16xf32>
    %94 = vector.shape_cast %93 : vector<1x16xf32> to vector<1x16x1xf32>
    %95 = tpu.reciprocal %94 {approx = true} : vector<1x16x1xf32> -> vector<1x16x1xf32>
    %96 = vector.broadcast %95 : vector<1x16x1xf32> to vector<1x16x16xf32>
    %97 = arith.mulf %92, %96 : vector<1x16x16xf32>
    %98 = arith.truncf %97 : vector<1x16x16xf32> to vector<1x16x16xbf16>
    "tpu.trace_start"() <{level = 10 : i32, message = "bqk,bkd->bqd"}> : () -> ()
    %cst_29 = arith.constant dense<0.000000e+00> : vector<1x16x32xf32>
    %99 = tpu.matmul %98, %86, %cst_29 {dimension_numbers = #tpu.dot_dimension_numbers<[2], [1], [1], [2], [0, 0, 0, 1, 1, 2], [0], [0]>} : vector<1x16x16xbf16>, vector<1x16x32xbf16>, vector<1x16x32xf32> -> vector<1x16x32xf32>
    "tpu.trace_stop"() : () -> ()
    %100 = vector.shape_cast %99 : vector<1x16x32xf32> to vector<16x32xf32>
    %101 = arith.truncf %100 : vector<16x32xf32> to vector<16x32xbf16>
    %c96 = arith.constant 96 : index
    %c0_30 = arith.constant 0 : index
    %102 = vector.load %arg4[%c96, %c0_30] : memref<128x128xbf16, #tpu.memory_space<vmem>>, vector<32x128xbf16>
    %cst_31 = arith.constant dense<0.000000e+00> : vector<16x128xf32>
    %103 = tpu.matmul %101, %102, %cst_31 {dimension_numbers = #tpu.dot_dimension_numbers<[1], [0], [0], [1], [0, 0, 1, 1], [], []>} : vector<16x32xbf16>, vector<32x128xbf16>, vector<16x128xf32> -> vector<16x128xf32>
    %104 = arith.addf %80, %103 : vector<16x128xf32>
    %c0_32 = arith.constant 0 : index
    %c0_33 = arith.constant 0 : index
    %105 = vector.load %arg5[%c0_32, %c0_33] : memref<1x128xf32, #tpu.memory_space<vmem>>, vector<1x128xf32>
    %106 = vector.broadcast %105 : vector<1x128xf32> to vector<16x128xf32>
    %107 = arith.addf %104, %106 : vector<16x128xf32>
    %108 = vector.shape_cast %107 : vector<16x128xf32> to vector<1x16x128xf32>
    %c0_34 = arith.constant 0 : index
    %c0_35 = arith.constant 0 : index
    %c0_36 = arith.constant 0 : index
    %109 = vector.load %arg6[%c0_34, %c0_35, %c0_36] : memref<1x16x128xf32, #tpu.memory_space<vmem>>, vector<1x16x128xf32>
    tpu.vector_store %arg6[%c0_34, %c0_35, %c0_36], %108 {strides = array<i32>} : memref<1x16x128xf32, #tpu.memory_space<vmem>>, vector<1x16x128xf32>,
    return
  }
  func.func @transform_0(%arg0: i32) -> (i32, i32, i32) {
    %c0_i32 = arith.constant 0 : i32
    %c0_i32_0 = arith.constant 0 : i32
    %c0_i32_1 = arith.constant 0 : i32
    return %arg0, %c0_i32, %c0_i32_0 : i32, i32, i32
  }
  func.func @transform_1(%arg0: i32) -> (i32, i32) {
    %c0_i32 = arith.constant 0 : i32
    %c0_i32_0 = arith.constant 0 : i32
    %c0_i32_1 = arith.constant 0 : i32
    return %c0_i32, %c0_i32_0 : i32, i32
  }
  func.func @transform_2(%arg0: i32) -> (i32, i32) {
    %c0_i32 = arith.constant 0 : i32
    %c0_i32_0 = arith.constant 0 : i32
    %c0_i32_1 = arith.constant 0 : i32
    return %c0_i32, %c0_i32_0 : i32, i32
  }
  func.func @transform_3(%arg0: i32) -> (i32, i32) {
    %c0_i32 = arith.constant 0 : i32
    %c0_i32_0 = arith.constant 0 : i32
    %c0_i32_1 = arith.constant 0 : i32
    return %c0_i32, %c0_i32_0 : i32, i32
  }
  func.func @transform_4(%arg0: i32) -> (i32, i32) {
    %c0_i32 = arith.constant 0 : i32
    %c0_i32_0 = arith.constant 0 : i32
    %c0_i32_1 = arith.constant 0 : i32
    return %c0_i32, %c0_i32_0 : i32, i32
  }
  func.func @transform_5(%arg0: i32) -> (i32, i32, i32) {
    %c0_i32 = arith.constant 0 : i32
    %c0_i32_0 = arith.constant 0 : i32
    %c0_i32_1 = arith.constant 0 : i32
    return %arg0, %c0_i32, %c0_i32_0 : i32, i32, i32
  }
}

</mosaic_0001>

<llo_original>
// kernel: tpu_custom_call.1
$region0: #{tpu_custom_call.1}
  #allocation0 [shape = 'u32[]', space=smem, size = 0x4, offset = 0x4, fixed_abs, tag = 'smem constant byte address 0x4 - core index']
  #allocation1 [shape = 'u32[144,128]{1,0:T(1,128)}', space=vmem, size = 0x12000, scoped, tag = 'internal scratch']
  %s0 = inlined_call_operand.hbm [shape: bf16[2,16,128], index: 0, kind: input, shape index: {}]
  %s1 = inlined_call_operand.hbm [shape: bf16[128,384], index: 1, kind: input, shape index: {}]
  %s2 = inlined_call_operand.vmem [shape: f32[1,384], index: 2, kind: input, shape index: {}]
  %s3 = inlined_call_operand.hbm [shape: bf16[128,128], index: 3, kind: input, shape index: {}]
  %s4 = inlined_call_operand.vmem [shape: f32[1,128], index: 4, kind: input, shape index: {}]
  %s5 = inlined_call_operand.hbm [shape: f32[2,16,128], index: 5, kind: output, shape index: {}]
  %s6 = sld [smem:[#allocation0]]
  $region65: #{tpu_custom_call.1} parent=0
    _
  %s8 = ssub.s32 1, %s6
  %s9 = scalar_select 0, %s8, %s6
  $region1: #{tpu_custom_call.1} parent=0
    #allocation2 [shape = 'u8[8192]{0}', space=vmem, size = 0x2000, scoped, tag = 'input window, operand 0']
    #allocation3 [shape = 's32[2]{0}', space=sflag, size = 0x8, scoped, tag = 'scoped memory for tpu_custom_call.1']
    #allocation4 [shape = 's32[2]{0}', space=sflag, size = 0x8, scoped, tag = 'scoped memory for tpu_custom_call.1']
    #allocation5 [shape = 'u8[98304]{0}', space=vmem, size = 0x18000, scoped, tag = 'input window, operand 1, single buffered']
    #allocation6 [shape = 's32[1]{0}', space=sflag, size = 0x4, scoped, tag = 'scoped memory for tpu_custom_call.1']
    #allocation7 [shape = 'u8[32768]{0}', space=vmem, size = 0x8000, scoped, tag = 'input window, operand 3, single buffered']
    #allocation8 [shape = 'u8[16384]{0}', space=vmem, size = 0x4000, scoped, tag = 'output window, operand 0']
    %10 = vsyncpa [#allocation3], 0
    %s11 = scalar_lea.sflag [#allocation3], 1
    %12 = vsyncpa %s11, 0
    %13 = vsyncpa [#allocation6], 0
    %14 = vsyncpa [#allocation4], 0
    %s15 = scalar_lea.sflag [#allocation4], 1
    %16 = vsyncpa %s15, 0
    loop: start=0, step=1, limit=4
    $region2: #{tpu_custom_call.1} parent=1 // loop_pre_header
      _
    $region3: #{tpu_custom_call.1} parent=1 // loop_header
      %s18 = sphi 0, %s22
      %p19 = scmp.ge.s32.totalorder %s18, 4
      %s28 = sphi 0, %s30
      %s31 = sphi 0, %s28
      %s32 = sphi 0, %s31
      %s48 = sphi 0, %s32
      %s52 = sphi 0, %s52
      %s54 = sphi 0, %s52
      %s55 = sphi 0, %s54
      %s69 = sphi 0, %s55
      %s73 = sphi 0, %s73
      %s75 = sphi 0, %s73
      %s76 = sphi 0, %s75
      %s90 = sphi 0, %s76
      %s94 = sphi 0, %s94
      %s96 = sphi 0, %s94
      %s97 = sphi 0, %s96
      %s111 = sphi 0, %s97
      %s115 = sphi 0, %s115
      %s117 = sphi 0, %s115
      %s118 = sphi 0, %s117
      %s132 = sphi 0, %s118
      %s138 = sphi 0, %s140
      %s141 = sphi 0, %s138
      %s142 = sphi 0, %s141
      %s158 = sphi 0, %s142
    $region4: #{tpu_custom_call.1} parent=1 // loop_header_branch
      %21 = sbr.rel (%p19) target = $region8
    $region5: #{tpu_custom_call.1} parent=1 // loop_body
      %s23 = ssub.s32 %s18, 1
      %s24 = ssub.s32 %s18, 2
      %s25 = sadd.s32 %s18, 1
      %s26 = ssub.s32 %s18, %s25
      %p27 = scmp.eq.s32.totalorder %s26, 0
      %s29 = sadd.s32 %s28, 1
      %s30 = scalar_select %p27, %s28, %s29
      %p33 = pneg %p27
      %p34 = scmp.eq.s32.totalorder %s18, 1
      %p35 = por %p33, %p34
      %p36 = scmp.ne.s32.totalorder %s28, %s31
      %p37 = scmp.eq.s32.totalorder %s18, 0
      %p38 = por %p36, %p37
      %p39 = scmp.ne.s32.totalorder %s28, %s31
      %p40 = scmp.eq.s32.totalorder %s23, 1
      %p41 = por %p39, %p40
      %p42 = scmp.ne.s32.totalorder %s31, %s32
      %p43 = scmp.eq.s32.totalorder %s23, 0
      %p44 = por %p42, %p43
      %p45 = scmp.ne.s32.totalorder %s31, %s32
      %p46 = scmp.eq.s32.totalorder %s24, 1
      %p47 = por %p45, %p46
      %p49 = scmp.ne.s32.totalorder %s32, %s48
      %p50 = scmp.eq.s32.totalorder %s24, 0
      %p51 = por %p49, %p50
      %s53 = sadd.s32 %s52, 1
      %p56 = scmp.eq.s32.totalorder %s18, 1
      %p57 = scmp.ne.s32.totalorder %s52, %s54
      %p58 = scmp.eq.s32.totalorder %s18, 0
      %p59 = por %p57, %p58
      %p60 = scmp.ne.s32.totalorder %s52, %s54
      %p61 = scmp.eq.s32.totalorder %s23, 1
      %p62 = por %p60, %p61
      %p63 = scmp.ne.s32.totalorder %s54, %s55
      %p64 = scmp.eq.s32.totalorder %s23, 0
      %p65 = por %p63, %p64
      %p66 = scmp.ne.s32.totalorder %s54, %s55
      %p67 = scmp.eq.s32.totalorder %s24, 1
      %p68 = por %p66, %p67
      %p70 = scmp.ne.s32.totalorder %s55, %s69
      %p71 = scmp.eq.s32.totalorder %s24, 0
      %p72 = por %p70, %p71
      %s74 = sadd.s32 %s73, 1
      %p77 = scmp.eq.s32.totalorder %s18, 1
      %p78 = scmp.ne.s32.totalorder %s73, %s75
      %p79 = scmp.eq.s32.totalorder %s18, 0
      %p80 = por %p78, %p79
      %p81 = scmp.ne.s32.totalorder %s73, %s75
      %p82 = scmp.eq.s32.totalorder %s23, 1
      %p83 = por %p81, %p82
      %p84 = scmp.ne.s32.totalorder %s75, %s76
      %p85 = scmp.eq.s32.totalorder %s23, 0
      %p86 = por %p84, %p85
      %p87 = scmp.ne.s32.totalorder %s75, %s76
      %p88 = scmp.eq.s32.totalorder %s24, 1
      %p89 = por %p87, %p88
      %p91 = scmp.ne.s32.totalorder %s76, %s90
      %p92 = scmp.eq.s32.totalorder %s24, 0
      %p93 = por %p91, %p92
      %s95 = sadd.s32 %s94, 1
      %p98 = scmp.eq.s32.totalorder %s18, 1
      %p99 = scmp.ne.s32.totalorder %s94, %s96
      %p100 = scmp.eq.s32.totalorder %s18, 0
      %p101 = por %p99, %p100
      %p102 = scmp.ne.s32.totalorder %s94, %s96
      %p103 = scmp.eq.s32.totalorder %s23, 1
      %p104 = por %p102, %p103
      %p105 = scmp.ne.s32.totalorder %s96, %s97
      %p106 = scmp.eq.s32.totalorder %s23, 0
      %p107 = por %p105, %p106
      %p108 = scmp.ne.s32.totalorder %s96, %s97
      %p109 = scmp.eq.s32.totalorder %s24, 1
      %p110 = por %p108, %p109
      %p112 = scmp.ne.s32.totalorder %s97, %s111
      %p113 = scmp.eq.s32.totalorder %s24, 0
      %p114 = por %p112, %p113
      %s116 = sadd.s32 %s115, 1
      %p119 = scmp.eq.s32.totalorder %s18, 1
      %p120 = scmp.ne.s32.totalorder %s115, %s117
      %p121 = scmp.eq.s32.totalorder %s18, 0
      %p122 = por %p120, %p121
      %p123 = scmp.ne.s32.totalorder %s115, %s117
      %p124 = scmp.eq.s32.totalorder %s23, 1
      %p125 = por %p123, %p124
      %p126 = scmp.ne.s32.totalorder %s117, %s118
      %p127 = scmp.eq.s32.totalorder %s23, 0
      %p128 = por %p126, %p127
      %p129 = scmp.ne.s32.totalorder %s117, %s118
      %p130 = scmp.eq.s32.totalorder %s24, 1
      %p131 = por %p129, %p130
      %p133 = scmp.ne.s32.totalorder %s118, %s132
      %p134 = scmp.eq.s32.totalorder %s24, 0
      %p135 = por %p133, %p134
      %s136 = ssub.s32 %s18, %s25
      %p137 = scmp.eq.s32.totalorder %s136, 0
      %s139 = sadd.s32 %s138, 1
      %s140 = scalar_select %p137, %s138, %s139
      %p143 = pneg %p137
      %p144 = scmp.eq.s32.totalorder %s18, 1
      %p145 = por %p143, %p144
      %p146 = scmp.ne.s32.totalorder %s138, %s141
      %p147 = scmp.eq.s32.totalorder %s18, 0
      %p148 = por %p146, %p147
      %p149 = scmp.ne.s32.totalorder %s138, %s141
      %p150 = scmp.eq.s32.totalorder %s23, 1
      %p151 = por %p149, %p150
      %p152 = scmp.ne.s32.totalorder %s141, %s142
      %p153 = scmp.eq.s32.totalorder %s23, 0
      %p154 = por %p152, %p153
      %p155 = scmp.ne.s32.totalorder %s141, %s142
      %p156 = scmp.eq.s32.totalorder %s24, 1
      %p157 = por %p155, %p156
      %p159 = scmp.ne.s32.totalorder %s142, %s158
      %p160 = scmp.eq.s32.totalorder %s24, 0
      %p161 = por %p159, %p160
      %p162 = scmp.le.s32.totalorder 1, %s18
      %p163 = scmp.lt.s32.totalorder %s18, 3
      %p164 = pnand %p162, %p163
      %p165 = pneg %p164
      // Predicated region
      $region9: #{tpu_custom_call.1} parent=5 // pred_check
        _
      $region10: #{tpu_custom_call.1} parent=5 // pred_check_branch
        %167 = sbr.rel (%p164) target = $region12
      $region11: #{tpu_custom_call.1} parent=5 // pred_region
        %s168 = ssub.s32 %s18, 1
        // Predicated region
        $region13: #{tpu_custom_call.1} parent=11 // pred_check
          %p169 = pneg %p65
        $region14: #{tpu_custom_call.1} parent=11 // pred_check_branch
          %171 = sbr.rel (%p169) target = $region16
        $region15: #{tpu_custom_call.1} parent=11 // pred_region
          %s173 = ssub.s32 3072, 3072
          %174 = vsyncadd [#allocation6], %s173
          %s175 = sshll.u32 [#allocation5], 4
          %s176 = int_to_ptr.vmem [resolvable:$true] %s175
          %181 = dma.hbm_to_vmem [thread:$0]  %s1, 3072, %s176, [#allocation6], 192, 192, 12
        $region16: #{tpu_custom_call.1} parent=11 // pred_fallthru
          _
        // Predicated region
        $region17: #{tpu_custom_call.1} parent=11 // pred_check
          %p182 = pneg %p86
        $region18: #{tpu_custom_call.1} parent=11 // pred_check_branch
          %184 = sbr.rel (%p182) target = $region20
        $region19: #{tpu_custom_call.1} parent=11 // pred_region
          _
        $region20: #{tpu_custom_call.1} parent=11 // pred_fallthru
          _
        // Predicated region
        $region21: #{tpu_custom_call.1} parent=11 // pred_check
          %p185 = pneg %p107
        $region22: #{tpu_custom_call.1} parent=11 // pred_check_branch
          %187 = sbr.rel (%p185) target = $region24
        $region23: #{tpu_custom_call.1} parent=11 // pred_region
          %s189 = ssub.s32 1024, 1024
          %190 = vsyncadd [#allocation6], %s189
          %s191 = sshll.u32 [#allocation7], 4
          %s192 = int_to_ptr.vmem [resolvable:$true] %s191
          %197 = dma.hbm_to_vmem [thread:$0]  %s3, 1024, %s192, [#allocation6], 64, 64, 4
        $region24: #{tpu_custom_call.1} parent=11 // pred_fallthru
          _
        // Predicated region
        $region25: #{tpu_custom_call.1} parent=11 // pred_check
          %p198 = pneg %p128
        $region26: #{tpu_custom_call.1} parent=11 // pred_check_branch
          %200 = sbr.rel (%p198) target = $region28
        $region27: #{tpu_custom_call.1} parent=11 // pred_region
          _
        $region28: #{tpu_custom_call.1} parent=11 // pred_fallthru
          _
      $region12: #{tpu_custom_call.1} parent=5 // pred_fallthru
        _
      %p201 = scmp.lt.s32.totalorder %s18, 2
      // Predicated region
      $region29: #{tpu_custom_call.1} parent=5 // pred_check
        %p202 = pneg %p201
      $region30: #{tpu_custom_call.1} parent=5 // pred_check_branch
        %204 = sbr.rel (%p202) target = $region32
      $region31: #{tpu_custom_call.1} parent=5 // pred_region
        // Predicated region
        $region33: #{tpu_custom_call.1} parent=31 // pred_check
          %p205 = pneg %p38
        $region34: #{tpu_custom_call.1} parent=31 // pred_check_branch
          %207 = sbr.rel (%p205) target = $region36
        $region35: #{tpu_custom_call.1} parent=31 // pred_region
          %s208 = sand.u32 %s28, 1
          %s209 = scalar_lea.sflag [#allocation3], %s208
          %s210 = sand.u32 %s28, 1
          %s211 = smul.addr %s210, 8
          %s212 = scalar_lea.vmem [#allocation2], %s211
          %s214 = ssub.s32 128, 128
          %215 = vsyncadd %s209, %s214
          %s216 = smul.addr %s18, 2
          %s217 = smul.addr %s216, 64
          %s218 = scalar_lea.hbm %s0, %s217
          %s219 = sshll.u32 %s212, 4
          %s220 = int_to_ptr.vmem [resolvable:$true] %s219
          %225 = dma.hbm_to_vmem [thread:$0]  %s218, 128, %s220, %s209, 64, 64, 4
        $region36: #{tpu_custom_call.1} parent=31 // pred_fallthru
          _
      $region32: #{tpu_custom_call.1} parent=5 // pred_fallthru
        _
      %p226 = scmp.le.s32.totalorder 1, %s18
      %p227 = scmp.lt.s32.totalorder %s18, 3
      %p228 = pnand %p226, %p227
      %p229 = pneg %p228
      // Predicated region
      $region37: #{tpu_custom_call.1} parent=5 // pred_check
        _
      $region38: #{tpu_custom_call.1} parent=5 // pred_check_branch
        %231 = sbr.rel (%p228) target = $region40
      $region39: #{tpu_custom_call.1} parent=5 // pred_region
        %s232 = ssub.s32 %s18, 1
        %s233 = sand.u32 %s31, 1
        %s234 = scalar_lea.sflag [#allocation3], %s233
        %s235 = sand.u32 %s31, 1
        %s236 = smul.addr %s235, 8
        %s237 = scalar_lea.vmem [#allocation2], %s236
        // Predicated region
        $region41: #{tpu_custom_call.1} parent=39 // pred_check
          %p238 = pneg %p44
        $region42: #{tpu_custom_call.1} parent=39 // pred_check_branch
          %240 = sbr.rel (%p238) target = $region44
        $region43: #{tpu_custom_call.1} parent=39 // pred_region
          %241 = dma.done %s234, 128
        $region44: #{tpu_custom_call.1} parent=39 // pred_fallthru
          _
        // Predicated region
        $region45: #{tpu_custom_call.1} parent=39 // pred_check
          %p242 = pneg %p65
        $region46: #{tpu_custom_call.1} parent=39 // pred_check_branch
          %244 = sbr.rel (%p242) target = $region48
        $region47: #{tpu_custom_call.1} parent=39 // pred_region
          %245 = dma.done [#allocation6], 3072
        $region48: #{tpu_custom_call.1} parent=39 // pred_fallthru
          _
        // Predicated region
        $region49: #{tpu_custom_call.1} parent=39 // pred_check
          %p246 = pneg %p107
        $region50: #{tpu_custom_call.1} parent=39 // pred_check_branch
          %248 = sbr.rel (%p246) target = $region52
        $region51: #{tpu_custom_call.1} parent=39 // pred_region
          %249 = dma.done [#allocation6], 1024
        $region52: #{tpu_custom_call.1} parent=39 // pred_fallthru
          _
        %s250 = sand.u32 %s31, 1
        %s251 = scalar_lea.sflag [#allocation3], %s250
        %s252 = sand.u32 %s31, 1
        %s253 = smul.addr %s252, 8
        %s254 = scalar_lea.vmem [#allocation2], %s253
        %p255 = pneg %p44
        %p256 = pneg %p41
        %p257 = pneg %p65
        %p258 = pneg %p62
        %p259 = pneg %p86
        %p260 = pneg %p83
        %p261 = pneg %p107
        %p262 = pneg %p104
        %p263 = pneg %p128
        %p264 = pneg %p125
        %p265 = pneg %p154
        %p266 = pneg %p151
        %s267 = sand.u32 %s141, 1
        %s268 = scalar_lea.sflag [#allocation4], %s267
        %s269 = sand.u32 %s141, 1
        %s270 = smul.addr %s269, 16
        %s271 = scalar_lea.vmem [#allocation8], %s270
        %v273 = vld [vmem:[%s237] sm:$0xf]
        %v274 = vld [vmem:[%s237 + $0x4] sm:$0xf]
        %v275 = vld [vmem:[#allocation5] sm:$0xff]
        %v276 = vld [vmem:[#allocation5 + $0x8] sm:$0xf]
        %v277 = vld [vmem:[#allocation5 + $0xc] sm:$0xff]
        %v278 = vld [vmem:[#allocation5 + $0x14] sm:$0xf]
        %v279 = vld [vmem:[#allocation5 + $0x18] sm:$0xff]
        %v280 = vld [vmem:[#allocation5 + $0x20] sm:$0xf]
        %v281 = vld [vmem:[#allocation5 + $0x24] sm:$0xff]
        %v282 = vld [vmem:[#allocation5 + $0x2c] sm:$0xf]
        %v283 = vld [vmem:[#allocation5 + $0x30] sm:$0xff]
        %v284 = vld [vmem:[#allocation5 + $0x38] sm:$0xf]
        %v285 = vld [vmem:[#allocation5 + $0x3c] sm:$0xff]
        %v286 = vld [vmem:[#allocation5 + $0x44] sm:$0xf]
        %v287 = vld [vmem:[#allocation5 + $0x48] sm:$0xff]
        %v288 = vld [vmem:[#allocation5 + $0x50] sm:$0xf]
        %v289 = vld [vmem:[#allocation5 + $0x54] sm:$0xff]
        %v290 = vld [vmem:[#allocation5 + $0x5c] sm:$0xf]
        %v291 = vld [vmem:[#allocation5 + $0x60] sm:$0xff]
        %v292 = vld [vmem:[#allocation5 + $0x68] sm:$0xf]
        %v293 = vld [vmem:[#allocation5 + $0x6c] sm:$0xff]
        %v294 = vld [vmem:[#allocation5 + $0x74] sm:$0xf]
        %v295 = vld [vmem:[#allocation5 + $0x78] sm:$0xff]
        %v296 = vld [vmem:[#allocation5 + $0x80] sm:$0xf]
        %v297 = vld [vmem:[#allocation5 + $0x84] sm:$0xff]
        %v298 = vld [vmem:[#allocation5 + $0x8c] sm:$0xf]
        %v299 = vld [vmem:[#allocation5 + $0x90] sm:$0xff]
        %v300 = vld [vmem:[#allocation5 + $0x98] sm:$0xf]
        %v301 = vld [vmem:[#allocation5 + $0x9c] sm:$0xff]
        %v302 = vld [vmem:[#allocation5 + $0xa4] sm:$0xf]
        %v303 = vld [vmem:[#allocation5 + $0xa8] sm:$0xff]
        %v304 = vld [vmem:[#allocation5 + $0xb0] sm:$0xf]
        %v305 = vld [vmem:[#allocation5 + $0xb4] sm:$0xff]
        %v306 = vld [vmem:[#allocation5 + $0xbc] sm:$0xf]
        %v307 = vld [vmem:[%s2] sm:$0x7]
        %v309 = vlaneseq
        %v310 = vshrl.u32 %v309, 7
        %v311 = vsub.s32 0, %v310
        %v312 = vrot.slane %v307, %v311
        %v313 = vlaneseq
        %v314 = vshrl.u32 %v313, 7
        %v315 = vsub.s32 1, %v314
        %v316 = vrot.slane %v307, %v315
        %v317 = vlaneseq
        %v318 = vshrl.u32 %v317, 7
        %v319 = vsub.s32 2, %v318
        %v320 = vrot.slane %v307, %v319
        %v326 = vunpack.c.l.b16 %v273
        %v327 = vunpack.c.l.b16 %v274
        %v328 = vpack.c.b16 %v327, %v326
        %v362 = vunpack.c.l.b16 %v275
        %v363 = vunpack.c.h.b16 %v275
        %v364 = vunpack.c.l.b16 %v276
        %v365 = vunpack.c.l.b16 %v277
        %v366 = vunpack.c.h.b16 %v277
        %v367 = vunpack.c.l.b16 %v278
        %v368 = vunpack.c.l.b16 %v279
        %v369 = vunpack.c.h.b16 %v279
        %v370 = vunpack.c.l.b16 %v280
        %v371 = vunpack.c.l.b16 %v281
        %v372 = vunpack.c.h.b16 %v281
        %v373 = vunpack.c.l.b16 %v282
        %v374 = vunpack.c.l.b16 %v283
        %v375 = vunpack.c.h.b16 %v283
        %v376 = vunpack.c.l.b16 %v284
        %v377 = vunpack.c.l.b16 %v285
        %v378 = vunpack.c.h.b16 %v285
        %v379 = vunpack.c.l.b16 %v286
        %v380 = vunpack.c.l.b16 %v287
        %v381 = vunpack.c.h.b16 %v287
        %v382 = vunpack.c.l.b16 %v288
        %v383 = vunpack.c.l.b16 %v289
        %v384 = vunpack.c.h.b16 %v289
        %v385 = vunpack.c.l.b16 %v290
        %v386 = vunpack.c.l.b16 %v291
        %v387 = vunpack.c.h.b16 %v291
        %v388 = vunpack.c.l.b16 %v292
        %v389 = vunpack.c.l.b16 %v293
        %v390 = vunpack.c.h.b16 %v293
        %v391 = vunpack.c.l.b16 %v294
        %v392 = vunpack.c.l.b16 %v295
        %v393 = vunpack.c.h.b16 %v295
        %v394 = vunpack.c.l.b16 %v296
        %v395 = vunpack.c.l.b16 %v297
        %v396 = vunpack.c.h.b16 %v297
        %v397 = vunpack.c.l.b16 %v298
        %v398 = vunpack.c.l.b16 %v299
        %v399 = vunpack.c.h.b16 %v299
        %v400 = vunpack.c.l.b16 %v300
        %v401 = vunpack.c.l.b16 %v301
        %v402 = vunpack.c.h.b16 %v301
        %v403 = vunpack.c.l.b16 %v302
        %v404 = vunpack.c.l.b16 %v303
        %v405 = vunpack.c.h.b16 %v303
        %v406 = vunpack.c.l.b16 %v304
        %v407 = vunpack.c.l.b16 %v305
        %v408 = vunpack.c.h.b16 %v305
        %v409 = vunpack.c.l.b16 %v306
        %v410 = vpack.c.b16 %v365, %v362
        %v411 = vpack.c.b16 %v366, %v363
        %v412 = vpack.c.b16 %v367, %v364
        %v413 = vpack.c.b16 %v371, %v368
        %v414 = vpack.c.b16 %v372, %v369
        %v415 = vpack.c.b16 %v373, %v370
        %v416 = vpack.c.b16 %v377, %v374
        %v417 = vpack.c.b16 %v378, %v375
        %v418 = vpack.c.b16 %v379, %v376
        %v419 = vpack.c.b16 %v383, %v380
        %v420 = vpack.c.b16 %v384, %v381
        %v421 = vpack.c.b16 %v385, %v382
        %v422 = vpack.c.b16 %v389, %v386
        %v423 = vpack.c.b16 %v390, %v387
        %v424 = vpack.c.b16 %v391, %v388
        %v425 = vpack.c.b16 %v395, %v392
        %v426 = vpack.c.b16 %v396, %v393
        %v427 = vpack.c.b16 %v397, %v394
        %v428 = vpack.c.b16 %v401, %v398
        %v429 = vpack.c.b16 %v402, %v399
        %v430 = vpack.c.b16 %v403, %v400
        %v431 = vpack.c.b16 %v407, %v404
        %v432 = vpack.c.b16 %v408, %v405
        %v433 = vpack.c.b16 %v409, %v406
        %458 = vmatprep.subr.bf16.mxu0 %v411
        %459 = vmatpush1.bf16.msra.mxu0 %v410
        %460 = vmatprep.subr.bf16.mxu0 %v414
        %461 = vmatpush1.bf16.msra.mxu0 %v413
        %462 = vmatprep.subr.bf16.mxu0 %v417
        %463 = vmatpush1.bf16.msra.mxu0 %v416
        %464 = vmatprep.subr.bf16.mxu0 %v420
        %465 = vmatpush1.bf16.msra.mxu0 %v419
        %466 = vmatprep.subr.bf16.mxu0 %v423
        %467 = vmatpush1.bf16.msra.mxu0 %v422
        %468 = vmatprep.subr.bf16.mxu0 %v426
        %469 = vmatpush1.bf16.msra.mxu0 %v425
        %470 = vmatprep.subr.bf16.mxu0 %v429
        %471 = vmatpush1.bf16.msra.mxu0 %v428
        %472 = vmatprep.subr.bf16.mxu0 %v432
        %473 = vmatpush1.bf16.msra.mxu0 %v431
        %474 = vmatprep.subr.bf16.mxu0 0
        %475 = vmatpush1.bf16.msra.mxu0 0
        %476 = vmatprep.subr.bf16.mxu0 0
        %477 = vmatpush1.bf16.msra.mxu0 0
        %478 = vmatprep.subr.bf16.mxu0 0
        %479 = vmatpush1.bf16.msra.mxu0 0
        %480 = vmatprep.subr.bf16.mxu0 0
        %481 = vmatpush1.bf16.msra.mxu0 0
        %482 = vmatprep.subr.bf16.mxu0 0
        %483 = vmatpush1.bf16.msra.mxu0 0
        %484 = vmatprep.subr.bf16.mxu0 0
        %485 = vmatpush1.bf16.msra.mxu0 0
        %486 = vmatprep.subr.bf16.mxu0 0
        %487 = vmatpush1.bf16.msra.mxu0 0
        %488 = vmatprep.subr.bf16.mxu0 0
        %489 = vmatpush1.bf16.msra.mxu0 0
        %490 = vmatprep.mubr.bf16.mxu0 0
        %491 = vmatmul.mubr.bf16.gmra.mrb[0].mxu0 %v328
        %v492 = vpop.f32.mrb[0].mxu0
        %v493 = vadd.f32 %v312, %v492
        %v494 = vpop.f32.mrb[0].mxu0
        %v495 = vadd.f32 %v316, %v494
        %v496 = vpop.f32.mrb[0].mxu0
        %v497 = vadd.f32 %v312, %v496
        %v498 = vpop.f32.mrb[0].mxu0
        %v499 = vadd.f32 %v316, %v498
        %500 = vdwg.mxu0
        %501 = vmatprep.subr.bf16.mxu0 0
        %502 = vmatpush1.bf16.msra.mxu0 %v412
        %503 = vmatprep.subr.bf16.mxu0 0
        %504 = vmatpush1.bf16.msra.mxu0 %v415
        %505 = vmatprep.subr.bf16.mxu0 0
        %506 = vmatpush1.bf16.msra.mxu0 %v418
        %507 = vmatprep.subr.bf16.mxu0 0
        %508 = vmatpush1.bf16.msra.mxu0 %v421
        %509 = vmatprep.subr.bf16.mxu0 0
        %510 = vmatpush1.bf16.msra.mxu0 %v424
        %511 = vmatprep.subr.bf16.mxu0 0
        %512 = vmatpush1.bf16.msra.mxu0 %v427
        %513 = vmatprep.subr.bf16.mxu0 0
        %514 = vmatpush1.bf16.msra.mxu0 %v430
        %515 = vmatprep.subr.bf16.mxu0 0
        %516 = vmatpush1.bf16.msra.mxu0 %v433
        %517 = vmatprep.subr.bf16.mxu0 0
        %518 = vmatpush1.bf16.msra.mxu0 0
        %519 = vmatprep.subr.bf16.mxu0 0
        %520 = vmatpush1.bf16.msra.mxu0 0
        %521 = vmatprep.subr.bf16.mxu0 0
        %522 = vmatpush1.bf16.msra.mxu0 0
        %523 = vmatprep.subr.bf16.mxu0 0
        %524 = vmatpush1.bf16.msra.mxu0 0
        %525 = vmatprep.subr.bf16.mxu0 0
        %526 = vmatpush1.bf16.msra.mxu0 0
        %527 = vmatprep.subr.bf16.mxu0 0
        %528 = vmatpush1.bf16.msra.mxu0 0
        %529 = vmatprep.subr.bf16.mxu0 0
        %530 = vmatpush1.bf16.msra.mxu0 0
        %531 = vmatprep.subr.bf16.mxu0 0
        %532 = vmatpush1.bf16.msra.mxu0 0
        %533 = vmatprep.mubr.bf16.mxu0 0
        %534 = vmatmul.mubr.bf16.gmra.mrb[0].mxu0 %v328
        %v535 = vpop.f32.mrb[0].mxu0
        %v536 = vadd.f32 %v320, %v535
        %v537 = vpop.f32.mrb[0].mxu0
        %v538 = vpop.f32.mrb[0].mxu0
        %v539 = vadd.f32 %v320, %v538
        %v540 = vpop.f32.mrb[0].mxu0
        %541 = vdwg.mxu0
        %v542 = vpack.c.bf16 %v497, %v493
        %v543 = vpack.c.bf16 %v499, %v495
        %v544 = vpack.c.bf16 %v539, %v536
        %vm545 = vcmask 261120
        %v547 = vsel %vm545, %v542, 0
        %v550 = vsel %vm545, %v543, 0
        %552 = vmatprep.subr.bf16.mxu0 0
        %553 = vmatpush1.bf16.xpose.msra.mxu0 %v550
        %554 = vmatprep.subr.bf16.mxu0 0
        %555 = vmatpush1.bf16.xpose.msra.mxu0 0
        %556 = vmatprep.subr.bf16.mxu0 0
        %557 = vmatpush1.bf16.xpose.msra.mxu0 0
        %558 = vmatprep.subr.bf16.mxu0 0
        %559 = vmatpush1.bf16.xpose.msra.mxu0 0
        %560 = vmatprep.subr.bf16.mxu0 0
        %561 = vmatpush1.bf16.xpose.msra.mxu0 0
        %562 = vmatprep.subr.bf16.mxu0 0
        %563 = vmatpush1.bf16.xpose.msra.mxu0 0
        %564 = vmatprep.subr.bf16.mxu0 0
        %565 = vmatpush1.bf16.xpose.msra.mxu0 0
        %566 = vmatprep.subr.bf16.mxu0 0
        %567 = vmatpush1.bf16.xpose.msra.mxu0 0
        %568 = vmatprep.subr.bf16.mxu0 0
        %569 = vmatpush1.bf16.xpose.msra.mxu0 0
        %570 = vmatprep.subr.bf16.mxu0 0
        %571 = vmatpush1.bf16.xpose.msra.mxu0 0
        %572 = vmatprep.subr.bf16.mxu0 0
        %573 = vmatpush1.bf16.xpose.msra.mxu0 0
        %574 = vmatprep.subr.bf16.mxu0 0
        %575 = vmatpush1.bf16.xpose.msra.mxu0 0
        %576 = vmatprep.subr.bf16.mxu0 0
        %577 = vmatpush1.bf16.xpose.msra.mxu0 0
        %578 = vmatprep.subr.bf16.mxu0 0
        %579 = vmatpush1.bf16.xpose.msra.mxu0 0
        %580 = vmatprep.subr.bf16.mxu0 0
        %581 = vmatpush1.bf16.xpose.msra.mxu0 0
        %582 = vmatprep.subr.bf16.mxu0 0
        %583 = vmatpush1.bf16.xpose.msra.mxu0 0
        %584 = vmatprep.mubr.bf16.mxu0 0
        %585 = vmatmul.mubr.bf16.gmra.mrb[0].mxu0 %v547
        %v586 = vpop.f32.mrb[0].mxu0
        %v587 = vadd.f32 0.0, %v586
        %v588 = vpop.f32.mrb[0].mxu0
        %v589 = vpop.f32.mrb[0].mxu0
        %v590 = vadd.f32 0.0, %v589
        %v591 = vpop.f32.mrb[0].mxu0
        %592 = vdwg.mxu0
        %vm593 = vcmask 130048
        %v594 = vsel %vm593, %v587, -inf
        %595 = vmax.xlane.f32.xlu0 %v594
        %v596 = vpop.xlane.xlu0 %595
        %v597 = vsel %vm593, %v590, -inf
        %598 = vmax.xlane.f32.xlu0 %v597
        %v599 = vpop.xlane.xlu0 %598
        %v600 = vsub.f32 %v587, %v596
        %v601 = vsub.f32 %v590, %v599
        %v602 = vmul.f32 %v600, 1.442695
        %v603 = vpow.pop %v602
        %v604 = vmul.f32 %v601, 1.442695
        %v605 = vpow.pop %v604
        %v606 = vsel %vm593, %v603, 0.0
        %607 = vadd.xlane.f32.xlu0 %v606
        %v608 = vpop.xlane.xlu0 %607
        %v609 = vsel %vm593, %v605, 0.0
        %610 = vadd.xlane.f32.xlu0 %v609
        %v611 = vpop.xlane.xlu0 %610
        %v612 = vrcp.pop %v608
        %v613 = vrcp.pop %v611
        %v614 = vmul.f32 %v603, %v612
        %v615 = vmul.f32 %v605, %v613
        %v616 = vpack.c.bf16 %v615, %v614
        %v618 = vsel %vm593, %v616, 0
        %620 = vmatprep.subr.bf16.mxu0 0
        %621 = vmatpush1.bf16.msra.mxu0 %v544
        %622 = vmatprep.subr.bf16.mxu0 0
        %623 = vmatpush1.bf16.msra.mxu0 0
        %624 = vmatprep.subr.bf16.mxu0 0
        %625 = vmatpush1.bf16.msra.mxu0 0
        %626 = vmatprep.subr.bf16.mxu0 0
        %627 = vmatpush1.bf16.msra.mxu0 0
        %628 = vmatprep.subr.bf16.mxu0 0
        %629 = vmatpush1.bf16.msra.mxu0 0
        %630 = vmatprep.subr.bf16.mxu0 0
        %631 = vmatpush1.bf16.msra.mxu0 0
        %632 = vmatprep.subr.bf16.mxu0 0
        %633 = vmatpush1.bf16.msra.mxu0 0
        %634 = vmatprep.subr.bf16.mxu0 0
        %635 = vmatpush1.bf16.msra.mxu0 0
        %636 = vmatprep.subr.bf16.mxu0 0
        %637 = vmatpush1.bf16.msra.mxu0 0
        %638 = vmatprep.subr.bf16.mxu0 0
        %639 = vmatpush1.bf16.msra.mxu0 0
        %640 = vmatprep.subr.bf16.mxu0 0
        %641 = vmatpush1.bf16.msra.mxu0 0
        %642 = vmatprep.subr.bf16.mxu0 0
        %643 = vmatpush1.bf16.msra.mxu0 0
        %644 = vmatprep.subr.bf16.mxu0 0
        %645 = vmatpush1.bf16.msra.mxu0 0
        %646 = vmatprep.subr.bf16.mxu0 0
        %647 = vmatpush1.bf16.msra.mxu0 0
        %648 = vmatprep.subr.bf16.mxu0 0
        %649 = vmatpush1.bf16.msra.mxu0 0
        %650 = vmatprep.subr.bf16.mxu0 0
        %651 = vmatpush1.bf16.msra.mxu0 0
        %652 = vmatprep.mubr.bf16.mxu0 0
        %653 = vmatmul.mubr.bf16.gmra.mrb[0].mxu0 %v618
        %v654 = vpop.f32.mrb[0].mxu0
        %v655 = vadd.f32 0.0, %v654
        %v656 = vpop.f32.mrb[0].mxu0
        %v657 = vpop.f32.mrb[0].mxu0
        %v658 = vadd.f32 0.0, %v657
        %v659 = vpop.f32.mrb[0].mxu0
        %660 = vdwg.mxu0
        %v661 = vpack.c.bf16 %v658, %v655
        %v662 = vld [vmem:[#allocation7] sm:$0xf]
        %v663 = vld [vmem:[#allocation7 + $0x4] sm:$0xf]
        %v664 = vld [vmem:[#allocation7 + $0x8] sm:$0xf]
        %v665 = vld [vmem:[#allocation7 + $0xc] sm:$0xf]
        %667 = vrot.lane.b32.xlu0 %v542, 96
        %v668 = vpop.permute.xlu0 %667
        %670 = vrot.lane.b32.xlu0 %v543, 96
        %v671 = vpop.permute.xlu0 %670
        %v673 = vsel %vm545, %v668, 0
        %v676 = vsel %vm545, %v671, 0
        %678 = vmatprep.subr.bf16.mxu0 0
        %679 = vmatpush1.bf16.xpose.msra.mxu0 %v676
        %680 = vmatprep.subr.bf16.mxu0 0
        %681 = vmatpush1.bf16.xpose.msra.mxu0 0
        %682 = vmatprep.subr.bf16.mxu0 0
        %683 = vmatpush1.bf16.xpose.msra.mxu0 0
        %684 = vmatprep.subr.bf16.mxu0 0
        %685 = vmatpush1.bf16.xpose.msra.mxu0 0
        %686 = vmatprep.subr.bf16.mxu0 0
        %687 = vmatpush1.bf16.xpose.msra.mxu0 0
        %688 = vmatprep.subr.bf16.mxu0 0
        %689 = vmatpush1.bf16.xpose.msra.mxu0 0
        %690 = vmatprep.subr.bf16.mxu0 0
        %691 = vmatpush1.bf16.xpose.msra.mxu0 0
        %692 = vmatprep.subr.bf16.mxu0 0
        %693 = vmatpush1.bf16.xpose.msra.mxu0 0
        %694 = vmatprep.subr.bf16.mxu0 0
        %695 = vmatpush1.bf16.xpose.msra.mxu0 0
        %696 = vmatprep.subr.bf16.mxu0 0
        %697 = vmatpush1.bf16.xpose.msra.mxu0 0
        %698 = vmatprep.subr.bf16.mxu0 0
        %699 = vmatpush1.bf16.xpose.msra.mxu0 0
        %700 = vmatprep.subr.bf16.mxu0 0
        %701 = vmatpush1.bf16.xpose.msra.mxu0 0
        %702 = vmatprep.subr.bf16.mxu0 0
        %703 = vmatpush1.bf16.xpose.msra.mxu0 0
        %704 = vmatprep.subr.bf16.mxu0 0
        %705 = vmatpush1.bf16.xpose.msra.mxu0 0
        %706 = vmatprep.subr.bf16.mxu0 0
        %707 = vmatpush1.bf16.xpose.msra.mxu0 0
        %708 = vmatprep.subr.bf16.mxu0 0
        %709 = vmatpush1.bf16.xpose.msra.mxu0 0
        %710 = vmatprep.mubr.bf16.mxu0 0
        %711 = vmatmul.mubr.bf16.gmra.mrb[0].mxu0 %v673
        %v712 = vpop.f32.mrb[0].mxu0
        %v713 = vadd.f32 0.0, %v712
        %v714 = vpop.f32.mrb[0].mxu0
        %v715 = vpop.f32.mrb[0].mxu0
        %v716 = vadd.f32 0.0, %v715
        %v717 = vpop.f32.mrb[0].mxu0
        %718 = vdwg.mxu0
        %v719 = vsel %vm593, %v713, -inf
        %720 = vmax.xlane.f32.xlu0 %v719
        %v721 = vpop.xlane.xlu0 %720
        %v722 = vsel %vm593, %v716, -inf
        %723 = vmax.xlane.f32.xlu0 %v722
        %v724 = vpop.xlane.xlu0 %723
        %v725 = vsub.f32 %v713, %v721
        %v726 = vsub.f32 %v716, %v724
        %v727 = vmul.f32 %v725, 1.442695
        %v728 = vpow.pop %v727
        %v729 = vmul.f32 %v726, 1.442695
        %v730 = vpow.pop %v729
        %v731 = vsel %vm593, %v728, 0.0
        %732 = vadd.xlane.f32.xlu0 %v731
        %v733 = vpop.xlane.xlu0 %732
        %v734 = vsel %vm593, %v730, 0.0
        %735 = vadd.xlane.f32.xlu0 %v734
        %v736 = vpop.xlane.xlu0 %735
        %v737 = vrcp.pop %v733
        %v738 = vrcp.pop %v736
        %v739 = vmul.f32 %v728, %v737
        %v740 = vmul.f32 %v730, %v738
        %v741 = vpack.c.bf16 %v740, %v739
        %743 = vrot.lane.b32.xlu0 %v544, 96
        %v744 = vpop.permute.xlu0 %743
        %v747 = vsel %vm593, %v741, 0
        %749 = vmatprep.subr.bf16.mxu0 0
        %750 = vmatpush1.bf16.msra.mxu0 %v744
        %751 = vmatprep.subr.bf16.mxu0 0
        %752 = vmatpush1.bf16.msra.mxu0 0
        %753 = vmatprep.subr.bf16.mxu0 0
        %754 = vmatpush1.bf16.msra.mxu0 0
        %755 = vmatprep.subr.bf16.mxu0 0
        %756 = vmatpush1.bf16.msra.mxu0 0
        %757 = vmatprep.subr.bf16.mxu0 0
        %758 = vmatpush1.bf16.msra.mxu0 0
        %759 = vmatprep.subr.bf16.mxu0 0
        %760 = vmatpush1.bf16.msra.mxu0 0
        %761 = vmatprep.subr.bf16.mxu0 0
        %762 = vmatpush1.bf16.msra.mxu0 0
        %763 = vmatprep.subr.bf16.mxu0 0
        %764 = vmatpush1.bf16.msra.mxu0 0
        %765 = vmatprep.subr.bf16.mxu0 0
        %766 = vmatpush1.bf16.msra.mxu0 0
        %767 = vmatprep.subr.bf16.mxu0 0
        %768 = vmatpush1.bf16.msra.mxu0 0
        %769 = vmatprep.subr.bf16.mxu0 0
        %770 = vmatpush1.bf16.msra.mxu0 0
        %771 = vmatprep.subr.bf16.mxu0 0
        %772 = vmatpush1.bf16.msra.mxu0 0
        %773 = vmatprep.subr.bf16.mxu0 0
        %774 = vmatpush1.bf16.msra.mxu0 0
        %775 = vmatprep.subr.bf16.mxu0 0
        %776 = vmatpush1.bf16.msra.mxu0 0
        %777 = vmatprep.subr.bf16.mxu0 0
        %778 = vmatpush1.bf16.msra.mxu0 0
        %779 = vmatprep.subr.bf16.mxu0 0
        %780 = vmatpush1.bf16.msra.mxu0 0
        %781 = vmatprep.mubr.bf16.mxu0 0
        %782 = vmatmul.mubr.bf16.gmra.mrb[0].mxu0 %v747
        %v783 = vpop.f32.mrb[0].mxu0
        %v784 = vadd.f32 0.0, %v783
        %v785 = vpop.f32.mrb[0].mxu0
        %v786 = vpop.f32.mrb[0].mxu0
        %v787 = vadd.f32 0.0, %v786
        %v788 = vpop.f32.mrb[0].mxu0
        %789 = vdwg.mxu0
        %v790 = vpack.c.bf16 %v787, %v784
        %v791 = vld [vmem:[#allocation7 + $0x10] sm:$0xf]
        %v792 = vld [vmem:[#allocation7 + $0x14] sm:$0xf]
        %v793 = vld [vmem:[#allocation7 + $0x18] sm:$0xf]
        %v794 = vld [vmem:[#allocation7 + $0x1c] sm:$0xf]
        %v799 = vunpack.c.l.b16 %v791
        %v800 = vunpack.c.l.b16 %v792
        %v801 = vunpack.c.l.b16 %v793
        %v802 = vunpack.c.l.b16 %v794
        %v803 = vpack.c.b16 %v800, %v799
        %v804 = vpack.c.b16 %v802, %v801
        %v808 = vsel %vm545, %v790, 0
        %810 = vmatprep.subr.bf16.mxu0 0
        %811 = vmatpush1.bf16.msra.mxu0 %v803
        %812 = vmatprep.subr.bf16.mxu0 0
        %813 = vmatpush1.bf16.msra.mxu0 %v804
        %814 = vmatprep.subr.bf16.mxu0 0
        %815 = vmatpush1.bf16.msra.mxu0 0
        %816 = vmatprep.subr.bf16.mxu0 0
        %817 = vmatpush1.bf16.msra.mxu0 0
        %818 = vmatprep.subr.bf16.mxu0 0
        %819 = vmatpush1.bf16.msra.mxu0 0
        %820 = vmatprep.subr.bf16.mxu0 0
        %821 = vmatpush1.bf16.msra.mxu0 0
        %822 = vmatprep.subr.bf16.mxu0 0
        %823 = vmatpush1.bf16.msra.mxu0 0
        %824 = vmatprep.subr.bf16.mxu0 0
        %825 = vmatpush1.bf16.msra.mxu0 0
        %826 = vmatprep.subr.bf16.mxu0 0
        %827 = vmatpush1.bf16.msra.mxu0 0
        %828 = vmatprep.subr.bf16.mxu0 0
        %829 = vmatpush1.bf16.msra.mxu0 0
        %830 = vmatprep.subr.bf16.mxu0 0
        %831 = vmatpush1.bf16.msra.mxu0 0
        %832 = vmatprep.subr.bf16.mxu0 0
        %833 = vmatpush1.bf16.msra.mxu0 0
        %834 = vmatprep.subr.bf16.mxu0 0
        %835 = vmatpush1.bf16.msra.mxu0 0
        %836 = vmatprep.subr.bf16.mxu0 0
        %837 = vmatpush1.bf16.msra.mxu0 0
        %838 = vmatprep.subr.bf16.mxu0 0
        %839 = vmatpush1.bf16.msra.mxu0 0
        %840 = vmatprep.subr.bf16.mxu0 0
        %841 = vmatpush1.bf16.msra.mxu0 0
        %842 = vmatprep.mubr.bf16.mxu0 0
        %843 = vmatmul.mubr.bf16.gmra.mrb[0].mxu0 %v808
        %v844 = vpop.f32.mrb[0].mxu0
        %v845 = vadd.f32 0.0, %v844
        %v846 = vpop.f32.mrb[0].mxu0
        %v847 = vpop.f32.mrb[0].mxu0
        %v848 = vadd.f32 0.0, %v847
        %v849 = vpop.f32.mrb[0].mxu0
        %850 = vdwg.mxu0
        %v855 = vunpack.c.l.b16 %v662
        %v856 = vunpack.c.l.b16 %v663
        %v857 = vunpack.c.l.b16 %v664
        %v858 = vunpack.c.l.b16 %v665
        %v859 = vpack.c.b16 %v856, %v855
        %v860 = vpack.c.b16 %v858, %v857
        %v864 = vsel %vm545, %v661, 0
        %866 = vmatprep.subr.bf16.mxu0 0
        %867 = vmatpush1.bf16.msra.mxu0 %v859
        %868 = vmatprep.subr.bf16.mxu0 0
        %869 = vmatpush1.bf16.msra.mxu0 %v860
        %870 = vmatprep.subr.bf16.mxu0 0
        %871 = vmatpush1.bf16.msra.mxu0 0
        %872 = vmatprep.subr.bf16.mxu0 0
        %873 = vmatpush1.bf16.msra.mxu0 0
        %874 = vmatprep.subr.bf16.mxu0 0
        %875 = vmatpush1.bf16.msra.mxu0 0
        %876 = vmatprep.subr.bf16.mxu0 0
        %877 = vmatpush1.bf16.msra.mxu0 0
        %878 = vmatprep.subr.bf16.mxu0 0
        %879 = vmatpush1.bf16.msra.mxu0 0
        %880 = vmatprep.subr.bf16.mxu0 0
        %881 = vmatpush1.bf16.msra.mxu0 0
        %882 = vmatprep.subr.bf16.mxu0 0
        %883 = vmatpush1.bf16.msra.mxu0 0
        %884 = vmatprep.subr.bf16.mxu0 0
        %885 = vmatpush1.bf16.msra.mxu0 0
        %886 = vmatprep.subr.bf16.mxu0 0
        %887 = vmatpush1.bf16.msra.mxu0 0
        %888 = vmatprep.subr.bf16.mxu0 0
        %889 = vmatpush1.bf16.msra.mxu0 0
        %890 = vmatprep.subr.bf16.mxu0 0
        %891 = vmatpush1.bf16.msra.mxu0 0
        %892 = vmatprep.subr.bf16.mxu0 0
        %893 = vmatpush1.bf16.msra.mxu0 0
        %894 = vmatprep.subr.bf16.mxu0 0
        %895 = vmatpush1.bf16.msra.mxu0 0
        %896 = vmatprep.subr.bf16.mxu0 0
        %897 = vmatpush1.bf16.msra.mxu0 0
        %898 = vmatprep.mubr.bf16.mxu0 0
        %899 = vmatmul.mubr.bf16.gmra.mrb[0].mxu0 %v864
        %v900 = vpop.f32.mrb[0].mxu0
        %v901 = vadd.f32 %v845, %v900
        %v902 = vpop.f32.mrb[0].mxu0
        %v903 = vpop.f32.mrb[0].mxu0
        %v904 = vadd.f32 %v848, %v903
        %v905 = vpop.f32.mrb[0].mxu0
        %906 = vdwg.mxu0
        %907 = vrot.lane.b32.xlu0 %v542, 64
        %v908 = vpop.permute.xlu0 %907
        %909 = vrot.lane.b32.xlu0 %v543, 64
        %v910 = vpop.permute.xlu0 %909
        %v912 = vsel %vm545, %v908, 0
        %v915 = vsel %vm545, %v910, 0
        %917 = vmatprep.subr.bf16.mxu0 0
        %918 = vmatpush1.bf16.xpose.msra.mxu0 %v915
        %919 = vmatprep.subr.bf16.mxu0 0
        %920 = vmatpush1.bf16.xpose.msra.mxu0 0
        %921 = vmatprep.subr.bf16.mxu0 0
        %922 = vmatpush1.bf16.xpose.msra.mxu0 0
        %923 = vmatprep.subr.bf16.mxu0 0
        %924 = vmatpush1.bf16.xpose.msra.mxu0 0
        %925 = vmatprep.subr.bf16.mxu0 0
        %926 = vmatpush1.bf16.xpose.msra.mxu0 0
        %927 = vmatprep.subr.bf16.mxu0 0
        %928 = vmatpush1.bf16.xpose.msra.mxu0 0
        %929 = vmatprep.subr.bf16.mxu0 0
        %930 = vmatpush1.bf16.xpose.msra.mxu0 0
        %931 = vmatprep.subr.bf16.mxu0 0
        %932 = vmatpush1.bf16.xpose.msra.mxu0 0
        %933 = vmatprep.subr.bf16.mxu0 0
        %934 = vmatpush1.bf16.xpose.msra.mxu0 0
        %935 = vmatprep.subr.bf16.mxu0 0
        %936 = vmatpush1.bf16.xpose.msra.mxu0 0
        %937 = vmatprep.subr.bf16.mxu0 0
        %938 = vmatpush1.bf16.xpose.msra.mxu0 0
        %939 = vmatprep.subr.bf16.mxu0 0
        %940 = vmatpush1.bf16.xpose.msra.mxu0 0
        %941 = vmatprep.subr.bf16.mxu0 0
        %942 = vmatpush1.bf16.xpose.msra.mxu0 0
        %943 = vmatprep.subr.bf16.mxu0 0
        %944 = vmatpush1.bf16.xpose.msra.mxu0 0
        %945 = vmatprep.subr.bf16.mxu0 0
        %946 = vmatpush1.bf16.xpose.msra.mxu0 0
        %947 = vmatprep.subr.bf16.mxu0 0
        %948 = vmatpush1.bf16.xpose.msra.mxu0 0
        %949 = vmatprep.mubr.bf16.mxu0 0
        %950 = vmatmul.mubr.bf16.gmra.mrb[0].mxu0 %v912
        %v951 = vpop.f32.mrb[0].mxu0
        %v952 = vadd.f32 0.0, %v951
        %v953 = vpop.f32.mrb[0].mxu0
        %v954 = vpop.f32.mrb[0].mxu0
        %v955 = vadd.f32 0.0, %v954
        %v956 = vpop.f32.mrb[0].mxu0
        %957 = vdwg.mxu0
        %v958 = vsel %vm593, %v952, -inf
        %959 = vmax.xlane.f32.xlu0 %v958
        %v960 = vpop.xlane.xlu0 %959
        %v961 = vsel %vm593, %v955, -inf
        %962 = vmax.xlane.f32.xlu0 %v961
        %v963 = vpop.xlane.xlu0 %962
        %v964 = vsub.f32 %v952, %v960
        %v965 = vsub.f32 %v955, %v963
        %v966 = vmul.f32 %v964, 1.442695
        %v967 = vpow.pop %v966
        %v968 = vmul.f32 %v965, 1.442695
        %v969 = vpow.pop %v968
        %v970 = vsel %vm593, %v967, 0.0
        %971 = vadd.xlane.f32.xlu0 %v970
        %v972 = vpop.xlane.xlu0 %971
        %v973 = vsel %vm593, %v969, 0.0
        %974 = vadd.xlane.f32.xlu0 %v973
        %v975 = vpop.xlane.xlu0 %974
        %v976 = vrcp.pop %v972
        %v977 = vrcp.pop %v975
        %v978 = vmul.f32 %v967, %v976
        %v979 = vmul.f32 %v969, %v977
        %v980 = vpack.c.bf16 %v979, %v978
        %981 = vrot.lane.b32.xlu0 %v544, 64
        %v982 = vpop.permute.xlu0 %981
        %v985 = vsel %vm593, %v980, 0
        %987 = vmatprep.subr.bf16.mxu0 0
        %988 = vmatpush1.bf16.msra.mxu0 %v982
        %989 = vmatprep.subr.bf16.mxu0 0
        %990 = vmatpush1.bf16.msra.mxu0 0
        %991 = vmatprep.subr.bf16.mxu0 0
        %992 = vmatpush1.bf16.msra.mxu0 0
        %993 = vmatprep.subr.bf16.mxu0 0
        %994 = vmatpush1.bf16.msra.mxu0 0
        %995 = vmatprep.subr.bf16.mxu0 0
        %996 = vmatpush1.bf16.msra.mxu0 0
        %997 = vmatprep.subr.bf16.mxu0 0
        %998 = vmatpush1.bf16.msra.mxu0 0
        %999 = vmatprep.subr.bf16.mxu0 0
        %1000 = vmatpush1.bf16.msra.mxu0 0
        %1001 = vmatprep.subr.bf16.mxu0 0
        %1002 = vmatpush1.bf16.msra.mxu0 0
        %1003 = vmatprep.subr.bf16.mxu0 0
        %1004 = vmatpush1.bf16.msra.mxu0 0
        %1005 = vmatprep.subr.bf16.mxu0 0
        %1006 = vmatpush1.bf16.msra.mxu0 0
        %1007 = vmatprep.subr.bf16.mxu0 0
        %1008 = vmatpush1.bf16.msra.mxu0 0
        %1009 = vmatprep.subr.bf16.mxu0 0
        %1010 = vmatpush1.bf16.msra.mxu0 0
        %1011 = vmatprep.subr.bf16.mxu0 0
        %1012 = vmatpush1.bf16.msra.mxu0 0
        %1013 = vmatprep.subr.bf16.mxu0 0
        %1014 = vmatpush1.bf16.msra.mxu0 0
        %1015 = vmatprep.subr.bf16.mxu0 0
        %1016 = vmatpush1.bf16.msra.mxu0 0
        %1017 = vmatprep.subr.bf16.mxu0 0
        %1018 = vmatpush1.bf16.msra.mxu0 0
        %1019 = vmatprep.mubr.bf16.mxu0 0
        %1020 = vmatmul.mubr.bf16.gmra.mrb[0].mxu0 %v985
        %v1021 = vpop.f32.mrb[0].mxu0
        %v1022 = vadd.f32 0.0, %v1021
        %v1023 = vpop.f32.mrb[0].mxu0
        %v1024 = vpop.f32.mrb[0].mxu0
        %v1025 = vadd.f32 0.0, %v1024
        %v1026 = vpop.f32.mrb[0].mxu0
        %1027 = vdwg.mxu0
        %v1028 = vpack.c.bf16 %v1025, %v1022
        %v1029 = vld [vmem:[#allocation7 + $0x20] sm:$0xf]
        %v1030 = vld [vmem:[#allocation7 + $0x24] sm:$0xf]
        %v1031 = vld [vmem:[#allocation7 + $0x28] sm:$0xf]
        %v1032 = vld [vmem:[#allocation7 + $0x2c] sm:$0xf]
        %v1037 = vunpack.c.l.b16 %v1029
        %v1038 = vunpack.c.l.b16 %v1030
        %v1039 = vunpack.c.l.b16 %v1031
        %v1040 = vunpack.c.l.b16 %v1032
        %v1041 = vpack.c.b16 %v1038, %v1037
        %v1042 = vpack.c.b16 %v1040, %v1039
        %v1046 = vsel %vm545, %v1028, 0
        %1048 = vmatprep.subr.bf16.mxu0 0
        %1049 = vmatpush1.bf16.msra.mxu0 %v1041
        %1050 = vmatprep.subr.bf16.mxu0 0
        %1051 = vmatpush1.bf16.msra.mxu0 %v1042
        %1052 = vmatprep.subr.bf16.mxu0 0
        %1053 = vmatpush1.bf16.msra.mxu0 0
        %1054 = vmatprep.subr.bf16.mxu0 0
        %1055 = vmatpush1.bf16.msra.mxu0 0
        %1056 = vmatprep.subr.bf16.mxu0 0
        %1057 = vmatpush1.bf16.msra.mxu0 0
        %1058 = vmatprep.subr.bf16.mxu0 0
        %1059 = vmatpush1.bf16.msra.mxu0 0
        %1060 = vmatprep.subr.bf16.mxu0 0
        %1061 = vmatpush1.bf16.msra.mxu0 0
        %1062 = vmatprep.subr.bf16.mxu0 0
        %1063 = vmatpush1.bf16.msra.mxu0 0
        %1064 = vmatprep.subr.bf16.mxu0 0
        %1065 = vmatpush1.bf16.msra.mxu0 0
        %1066 = vmatprep.subr.bf16.mxu0 0
        %1067 = vmatpush1.bf16.msra.mxu0 0
        %1068 = vmatprep.subr.bf16.mxu0 0
        %1069 = vmatpush1.bf16.msra.mxu0 0
        %1070 = vmatprep.subr.bf16.mxu0 0
        %1071 = vmatpush1.bf16.msra.mxu0 0
        %1072 = vmatprep.subr.bf16.mxu0 0
        %1073 = vmatpush1.bf16.msra.mxu0 0
        %1074 = vmatprep.subr.bf16.mxu0 0
        %1075 = vmatpush1.bf16.msra.mxu0 0
        %1076 = vmatprep.subr.bf16.mxu0 0
        %1077 = vmatpush1.bf16.msra.mxu0 0
        %1078 = vmatprep.subr.bf16.mxu0 0
        %1079 = vmatpush1.bf16.msra.mxu0 0
        %1080 = vmatprep.mubr.bf16.mxu0 0
        %1081 = vmatmul.mubr.bf16.gmra.mrb[0].mxu0 %v1046
        %v1082 = vpop.f32.mrb[0].mxu0
        %v1083 = vadd.f32 0.0, %v1082
        %v1084 = vpop.f32.mrb[0].mxu0
        %v1085 = vpop.f32.mrb[0].mxu0
        %v1086 = vadd.f32 0.0, %v1085
        %v1087 = vpop.f32.mrb[0].mxu0
        %1088 = vdwg.mxu0
        %v1089 = vadd.f32 %v901, %v1083
        %v1090 = vadd.f32 %v904, %v1086
        %1091 = vrot.lane.b32.xlu0 %v542, 32
        %v1092 = vpop.permute.xlu0 %1091
        %1093 = vrot.lane.b32.xlu0 %v543, 32
        %v1094 = vpop.permute.xlu0 %1093
        %v1096 = vsel %vm545, %v1092, 0
        %v1099 = vsel %vm545, %v1094, 0
        %1101 = vmatprep.subr.bf16.mxu0 0
        %1102 = vmatpush1.bf16.xpose.msra.mxu0 %v1099
        %1103 = vmatprep.subr.bf16.mxu0 0
        %1104 = vmatpush1.bf16.xpose.msra.mxu0 0
        %1105 = vmatprep.subr.bf16.mxu0 0
        %1106 = vmatpush1.bf16.xpose.msra.mxu0 0
        %1107 = vmatprep.subr.bf16.mxu0 0
        %1108 = vmatpush1.bf16.xpose.msra.mxu0 0
        %1109 = vmatprep.subr.bf16.mxu0 0
        %1110 = vmatpush1.bf16.xpose.msra.mxu0 0
        %1111 = vmatprep.subr.bf16.mxu0 0
        %1112 = vmatpush1.bf16.xpose.msra.mxu0 0
        %1113 = vmatprep.subr.bf16.mxu0 0
        %1114 = vmatpush1.bf16.xpose.msra.mxu0 0
        %1115 = vmatprep.subr.bf16.mxu0 0
        %1116 = vmatpush1.bf16.xpose.msra.mxu0 0
        %1117 = vmatprep.subr.bf16.mxu0 0
        %1118 = vmatpush1.bf16.xpose.msra.mxu0 0
        %1119 = vmatprep.subr.bf16.mxu0 0
        %1120 = vmatpush1.bf16.xpose.msra.mxu0 0
        %1121 = vmatprep.subr.bf16.mxu0 0
        %1122 = vmatpush1.bf16.xpose.msra.mxu0 0
        %1123 = vmatprep.subr.bf16.mxu0 0
        %1124 = vmatpush1.bf16.xpose.msra.mxu0 0
        %1125 = vmatprep.subr.bf16.mxu0 0
        %1126 = vmatpush1.bf16.xpose.msra.mxu0 0
        %1127 = vmatprep.subr.bf16.mxu0 0
        %1128 = vmatpush1.bf16.xpose.msra.mxu0 0
        %1129 = vmatprep.subr.bf16.mxu0 0
        %1130 = vmatpush1.bf16.xpose.msra.mxu0 0
        %1131 = vmatprep.subr.bf16.mxu0 0
        %1132 = vmatpush1.bf16.xpose.msra.mxu0 0
        %1133 = vmatprep.mubr.bf16.mxu0 0
        %1134 = vmatmul.mubr.bf16.gmra.mrb[0].mxu0 %v1096
        %v1135 = vpop.f32.mrb[0].mxu0
        %v1136 = vadd.f32 0.0, %v1135
        %v1137 = vpop.f32.mrb[0].mxu0
        %v1138 = vpop.f32.mrb[0].mxu0
        %v1139 = vadd.f32 0.0, %v1138
        %v1140 = vpop.f32.mrb[0].mxu0
        %1141 = vdwg.mxu0
        %v1142 = vsel %vm593, %v1136, -inf
        %1143 = vmax.xlane.f32.xlu0 %v1142
        %v1144 = vpop.xlane.xlu0 %1143
        %v1145 = vsel %vm593, %v1139, -inf
        %1146 = vmax.xlane.f32.xlu0 %v1145
        %v1147 = vpop.xlane.xlu0 %1146
        %v1148 = vsub.f32 %v1136, %v1144
        %v1149 = vsub.f32 %v1139, %v1147
        %v1150 = vmul.f32 %v1148, 1.442695
        %v1151 = vpow.pop %v1150
        %v1152 = vmul.f32 %v1149, 1.442695
        %v1153 = vpow.pop %v1152
        %v1154 = vsel %vm593, %v1151, 0.0
        %1155 = vadd.xlane.f32.xlu0 %v1154
        %v1156 = vpop.xlane.xlu0 %1155
        %v1157 = vsel %vm593, %v1153, 0.0
        %1158 = vadd.xlane.f32.xlu0 %v1157
        %v1159 = vpop.xlane.xlu0 %1158
        %v1160 = vrcp.pop %v1156
        %v1161 = vrcp.pop %v1159
        %v1162 = vmul.f32 %v1151, %v1160
        %v1163 = vmul.f32 %v1153, %v1161
        %v1164 = vpack.c.bf16 %v1163, %v1162
        %1165 = vrot.lane.b32.xlu0 %v544, 32
        %v1166 = vpop.permute.xlu0 %1165
        %v1169 = vsel %vm593, %v1164, 0
        %1171 = vmatprep.subr.bf16.mxu0 0
        %1172 = vmatpush1.bf16.msra.mxu0 %v1166
        %1173 = vmatprep.subr.bf16.mxu0 0
        %1174 = vmatpush1.bf16.msra.mxu0 0
        %1175 = vmatprep.subr.bf16.mxu0 0
        %1176 = vmatpush1.bf16.msra.mxu0 0
        %1177 = vmatprep.subr.bf16.mxu0 0
        %1178 = vmatpush1.bf16.msra.mxu0 0
        %1179 = vmatprep.subr.bf16.mxu0 0
        %1180 = vmatpush1.bf16.msra.mxu0 0
        %1181 = vmatprep.subr.bf16.mxu0 0
        %1182 = vmatpush1.bf16.msra.mxu0 0
        %1183 = vmatprep.subr.bf16.mxu0 0
        %1184 = vmatpush1.bf16.msra.mxu0 0
        %1185 = vmatprep.subr.bf16.mxu0 0
        %1186 = vmatpush1.bf16.msra.mxu0 0
        %1187 = vmatprep.subr.bf16.mxu0 0
        %1188 = vmatpush1.bf16.msra.mxu0 0
        %1189 = vmatprep.subr.bf16.mxu0 0
        %1190 = vmatpush1.bf16.msra.mxu0 0
        %1191 = vmatprep.subr.bf16.mxu0 0
        %1192 = vmatpush1.bf16.msra.mxu0 0
        %1193 = vmatprep.subr.bf16.mxu0 0
        %1194 = vmatpush1.bf16.msra.mxu0 0
        %1195 = vmatprep.subr.bf16.mxu0 0
        %1196 = vmatpush1.bf16.msra.mxu0 0
        %1197 = vmatprep.subr.bf16.mxu0 0
        %1198 = vmatpush1.bf16.msra.mxu0 0
        %1199 = vmatprep.subr.bf16.mxu0 0
        %1200 = vmatpush1.bf16.msra.mxu0 0
        %1201 = vmatprep.subr.bf16.mxu0 0
        %1202 = vmatpush1.bf16.msra.mxu0 0
        %1203 = vmatprep.mubr.bf16.mxu0 0
        %1204 = vmatmul.mubr.bf16.gmra.mrb[0].mxu0 %v1169
        %v1205 = vpop.f32.mrb[0].mxu0
        %v1206 = vadd.f32 0.0, %v1205
        %v1207 = vpop.f32.mrb[0].mxu0
        %v1208 = vpop.f32.mrb[0].mxu0
        %v1209 = vadd.f32 0.0, %v1208
        %v1210 = vpop.f32.mrb[0].mxu0
        %1211 = vdwg.mxu0
        %v1212 = vpack.c.bf16 %v1209, %v1206
        %v1213 = vld [vmem:[#allocation7 + $0x30] sm:$0xf]
        %v1214 = vld [vmem:[#allocation7 + $0x34] sm:$0xf]
        %v1215 = vld [vmem:[#allocation7 + $0x38] sm:$0xf]
        %v1216 = vld [vmem:[#allocation7 + $0x3c] sm:$0xf]
        %v1221 = vunpack.c.l.b16 %v1213
        %v1222 = vunpack.c.l.b16 %v1214
        %v1223 = vunpack.c.l.b16 %v1215
        %v1224 = vunpack.c.l.b16 %v1216
        %v1225 = vpack.c.b16 %v1222, %v1221
        %v1226 = vpack.c.b16 %v1224, %v1223
        %v1230 = vsel %vm545, %v1212, 0
        %1232 = vmatprep.subr.bf16.mxu0 0
        %1233 = vmatpush1.bf16.msra.mxu0 %v1225
        %1234 = vmatprep.subr.bf16.mxu0 0
        %1235 = vmatpush1.bf16.msra.mxu0 %v1226
        %1236 = vmatprep.subr.bf16.mxu0 0
        %1237 = vmatpush1.bf16.msra.mxu0 0
        %1238 = vmatprep.subr.bf16.mxu0 0
        %1239 = vmatpush1.bf16.msra.mxu0 0
        %1240 = vmatprep.subr.bf16.mxu0 0
        %1241 = vmatpush1.bf16.msra.mxu0 0
        %1242 = vmatprep.subr.bf16.mxu0 0
        %1243 = vmatpush1.bf16.msra.mxu0 0
        %1244 = vmatprep.subr.bf16.mxu0 0
        %1245 = vmatpush1.bf16.msra.mxu0 0
        %1246 = vmatprep.subr.bf16.mxu0 0
        %1247 = vmatpush1.bf16.msra.mxu0 0
        %1248 = vmatprep.subr.bf16.mxu0 0
        %1249 = vmatpush1.bf16.msra.mxu0 0
        %1250 = vmatprep.subr.bf16.mxu0 0
        %1251 = vmatpush1.bf16.msra.mxu0 0
        %1252 = vmatprep.subr.bf16.mxu0 0
        %1253 = vmatpush1.bf16.msra.mxu0 0
        %1254 = vmatprep.subr.bf16.mxu0 0
        %1255 = vmatpush1.bf16.msra.mxu0 0
        %1256 = vmatprep.subr.bf16.mxu0 0
        %1257 = vmatpush1.bf16.msra.mxu0 0
        %1258 = vmatprep.subr.bf16.mxu0 0
        %1259 = vmatpush1.bf16.msra.mxu0 0
        %1260 = vmatprep.subr.bf16.mxu0 0
        %1261 = vmatpush1.bf16.msra.mxu0 0
        %1262 = vmatprep.subr.bf16.mxu0 0
        %1263 = vmatpush1.bf16.msra.mxu0 0
        %1264 = vmatprep.mubr.bf16.mxu0 0
        %1265 = vmatmul.mubr.bf16.gmra.mrb[0].mxu0 %v1230
        %v1266 = vpop.f32.mrb[0].mxu0
        %v1267 = vadd.f32 0.0, %v1266
        %v1268 = vpop.f32.mrb[0].mxu0
        %v1269 = vpop.f32.mrb[0].mxu0
        %v1270 = vadd.f32 0.0, %v1269
        %v1271 = vpop.f32.mrb[0].mxu0
        %1272 = vdwg.mxu0
        %v1273 = vadd.f32 %v1089, %v1267
        %v1274 = vadd.f32 %v1090, %v1270
        %v1275 = vld [vmem:[%s4] sm:$0x1]
        %v1277 = vlaneseq
        %v1278 = vshrl.u32 %v1277, 7
        %v1279 = vsub.s32 0, %v1278
        %v1280 = vrot.slane %v1275, %v1279
        %v1282 = vadd.f32 %v1273, %v1280
        %v1283 = vadd.f32 %v1274, %v1280
        %1284 = vst [vmem:[%s271] sm:$0xff] %v1282
        %1285 = vst [vmem:[%s271 + $0x8] sm:$0xff] %v1283
        %s1286 = sand.u32 %s141, 1
        %s1287 = scalar_lea.sflag [#allocation4], %s1286
        %s1288 = sand.u32 %s141, 1
        %s1289 = smul.addr %s1288, 16
        %s1290 = scalar_lea.vmem [#allocation8], %s1289
        // Predicated region
        $region53: #{tpu_custom_call.1} parent=39 // pred_check
          %p1291 = pneg %p151
        $region54: #{tpu_custom_call.1} parent=39 // pred_check_branch
          %1293 = sbr.rel (%p1291) target = $region56
        $region55: #{tpu_custom_call.1} parent=39 // pred_region
          %s1295 = ssub.s32 256, 256
          %1296 = vsyncadd %s1287, %s1295
          %s1297 = smul.addr %s23, 2
          %s1298 = smul.addr %s1297, 128
          %s1299 = scalar_lea.hbm %s5, %s1298
          %s1300 = sshll.u32 %s1290, 4
          %s1301 = int_to_ptr.vmem [resolvable:$true] %s1300
          %1306 = dma.vmem_to_hbm [thread:$0]  %s1301, 256, %s1299, %s1287, 128, 128, 8
        $region56: #{tpu_custom_call.1} parent=39 // pred_fallthru
          _
      $region40: #{tpu_custom_call.1} parent=5 // pred_fallthru
        _
      %p1307 = scmp.le.s32.totalorder 2, %s18
      // Predicated region
      $region57: #{tpu_custom_call.1} parent=5 // pred_check
        %p1308 = pneg %p1307
      $region58: #{tpu_custom_call.1} parent=5 // pred_check_branch
        %1310 = sbr.rel (%p1308) target = $region60
      $region59: #{tpu_custom_call.1} parent=5 // pred_region
        %s1311 = ssub.s32 %s18, 2
        // Predicated region
        $region61: #{tpu_custom_call.1} parent=59 // pred_check
          %p1312 = pneg %p157
        $region62: #{tpu_custom_call.1} parent=59 // pred_check_branch
          %1314 = sbr.rel (%p1312) target = $region64
        $region63: #{tpu_custom_call.1} parent=59 // pred_region
          %s1315 = sand.u32 %s142, 1
          %s1316 = scalar_lea.sflag [#allocation4], %s1315
          %s1317 = sand.u32 %s142, 1
          %s1318 = smul.addr %s1317, 16
          %s1319 = scalar_lea.vmem [#allocation8], %s1318
          %1320 = dma.done %s1316, 256
        $region64: #{tpu_custom_call.1} parent=59 // pred_fallthru
          _
      $region60: #{tpu_custom_call.1} parent=5 // pred_fallthru
        _
    $region6: #{tpu_custom_call.1} parent=1 // loop_footer
      %s22 = sadd.s32 1, %s18
    $region7: #{tpu_custom_call.1} parent=1 // loop_footer_branch
      %17 = sbr.rel target = $region3
    $region8: #{tpu_custom_call.1} parent=1 // loop_exit
      _
    %1321 = vsyncpa [#allocation3], 1
    %s1322 = scalar_lea.sflag [#allocation3], 1
    %1323 = vsyncpa %s1322, 1
    %1324 = vsyncpa [#allocation6], 1
    %1325 = vsyncpa [#allocation4], 1
    %s1326 = scalar_lea.sflag [#allocation4], 1
    %1327 = vsyncpa %s1326, 1

</llo_original>
